<compile_context>
chip_gen: v7x
topology: tpu7x:2x2x1
jax: 0.10.0
libtpu: 0.0.40
codegen_flags: <defaults>
</compile_context>

<pallas_src>
import functools

import jax
import jax.numpy as jnp
from jax.experimental import pallas as pl
from jax.experimental.pallas import tpu as pltpu


def _pick_tile(n, cap=256):
    """Largest power-of-two tile <= cap that divides n (falls back to full n)."""
    for t in (256, 128, 64, 32, 16, 8):
        if t <= cap and t <= n and n % t == 0:
            return t
    return n


def attention_kernel(xq_ref, xkv_ref, wq_ref, wk_ref, wv_ref, wout_ref, o_ref,
                     q_sc, m_sc, l_sc, acc_sc, *, heads, dim_head, scale):
    # xq_ref:  (1, tq, dim)   query-side rows of x
    # xkv_ref: (1, tk, dim)   key/value-side rows of x
    # wq/wk/wv_ref: (dim, inner); wout_ref: (inner, dim)   ([in, out] layout)
    # o_ref:   (1, tq, dim)
    # scratch: q_sc (tq, inner), m_sc/l_sc (heads, tq, 1), acc_sc (tq, inner), all f32
    ki = pl.program_id(2)
    nk = pl.num_programs(2)

    @pl.when(ki == 0)
    def _init():
        xq = xq_ref[0]                                            # (tq, dim)
        # Q projection once per (b, q-tile); fold the softmax scale into q.
        q_sc[...] = jnp.dot(xq, wq_ref[...],
                            preferred_element_type=jnp.float32) * scale
        m_sc[...] = jnp.full_like(m_sc, -jnp.inf)
        l_sc[...] = jnp.zeros_like(l_sc)
        acc_sc[...] = jnp.zeros_like(acc_sc)

    # K / V projections for this kv tile (single wide MXU dots).
    xkv = xkv_ref[0]                                              # (tk, dim)
    k = jnp.dot(xkv, wk_ref[...], preferred_element_type=jnp.float32)  # (tk, inner)
    v = jnp.dot(xkv, wv_ref[...], preferred_element_type=jnp.float32)  # (tk, inner)

    # Per-head online softmax on lane-contiguous, statically-sliced 2-D slabs
    # (no head-axis reshape / transpose).
    for h in range(heads):
        sl = slice(h * dim_head, (h + 1) * dim_head)
        qh = q_sc[:, sl]                                          # (tq, dh)
        s = jax.lax.dot_general(qh, k[:, sl], (((1,), (1,)), ((), ())),
                                preferred_element_type=jnp.float32)  # (tq, tk)
        m_prev = m_sc[h]                                          # (tq, 1)
        m_new = jnp.maximum(m_prev, jnp.max(s, axis=-1, keepdims=True))
        alpha = jnp.exp(m_prev - m_new)
        p = jnp.exp(s - m_new)                                    # (tq, tk)
        l_sc[h] = alpha * l_sc[h] + jnp.sum(p, axis=-1, keepdims=True)
        acc_sc[:, sl] = alpha * acc_sc[:, sl] + jnp.dot(
            p, v[:, sl], preferred_element_type=jnp.float32)
        m_sc[h] = m_new

    @pl.when(ki == nk - 1)
    def _finalize():
        # Normalize each head by its softmax denominator (EUP approx reciprocal),
        # then apply the output projection and write the tile back.
        for h in range(heads):
            sl = slice(h * dim_head, (h + 1) * dim_head)
            acc_sc[:, sl] = acc_sc[:, sl] * pl.reciprocal(l_sc[h], approx=True)
        o_ref[0] = jnp.dot(acc_sc[...], wout_ref[...],
                           preferred_element_type=jnp.float32).astype(o_ref.dtype)


@functools.partial(jax.jit, static_argnames=("heads", "dim_head"))
def attention_forward(x, w_qkv, w_out, *, heads, dim_head):
    B, N, dim = x.shape
    inner = heads * dim_head
    scale = dim_head ** (-0.5)

    # Split the fused qkv weight into lane-aligned per-projection blocks.
    w_q = w_qkv[:, 0 * inner:1 * inner]
    w_k = w_qkv[:, 1 * inner:2 * inner]
    w_v = w_qkv[:, 2 * inner:3 * inner]

    tq = _pick_tile(N)
    tk = _pick_tile(N)
    n_q = N // tq if N % tq == 0 else 1
    n_k = N // tk if N % tk == 0 else 1

    kernel = functools.partial(attention_kernel, heads=heads, dim_head=dim_head,
                               scale=scale)

    flops = (2 * B * N * dim * 3 * inner            # qkv projection
             + 4 * B * heads * N * N * dim_head     # q@k^T and attn@v
             + 2 * B * N * inner * dim)             # output projection
    cost = pl.CostEstimate(
        flops=flops,
        transcendentals=B * heads * N * N,
        bytes_accessed=4 * (2 * x.size + w_qkv.size + w_out.size + B * N * dim))

    # TODO(synk): for very small N*dim and large B, packing several batch rows
    # per grid step would further amortize the ~0.35us/step pipeline overhead.
    return pl.pallas_call(
        kernel,
        out_shape=jax.ShapeDtypeStruct((B, N, dim), x.dtype),
        grid_spec=pltpu.PrefetchScalarGridSpec(
            num_scalar_prefetch=0,
            grid=(B, n_q, n_k),
            in_specs=[
                pl.BlockSpec((1, tq, dim), lambda b, qi, ki: (b, qi, 0)),   # x (q rows)
                pl.BlockSpec((1, tk, dim), lambda b, qi, ki: (b, ki, 0)),   # x (kv rows)
                pl.BlockSpec((dim, inner), lambda b, qi, ki: (0, 0)),       # w_q
                pl.BlockSpec((dim, inner), lambda b, qi, ki: (0, 0)),       # w_k
                pl.BlockSpec((dim, inner), lambda b, qi, ki: (0, 0)),       # w_v
                pl.BlockSpec((inner, dim), lambda b, qi, ki: (0, 0)),       # w_out
            ],
            out_specs=pl.BlockSpec((1, tq, dim), lambda b, qi, ki: (b, qi, 0)),
            scratch_shapes=[
                pltpu.VMEM((tq, inner), jnp.float32),      # pre-scaled q
                pltpu.VMEM((heads, tq, 1), jnp.float32),   # running max m
                pltpu.VMEM((heads, tq, 1), jnp.float32),   # running denom l
                pltpu.VMEM((tq, inner), jnp.float32),      # unnormalized acc
            ],
        ),
        compiler_params=pltpu.CompilerParams(
            dimension_semantics=("parallel", "parallel", "arbitrary"),
            vmem_limit_bytes=32 * 1024 * 1024),
        cost_estimate=cost,
    )(x, x, w_q, w_k, w_v, w_out)


def reference_forward(x, w_qkv, w_out, *, heads, dim_head):
    B, N, dim = x.shape
    inner = heads * dim_head
    scale = dim_head ** (-0.5)
    qkv = jnp.einsum('bnd,de->bne', x, w_qkv)
    q, k, v = jnp.split(qkv, 3, axis=-1)

    def split_heads(t):
        return t.reshape(B, N, heads, dim_head).transpose(0, 2, 1, 3)

    q, k, v = map(split_heads, (q, k, v))
    dots = jnp.einsum('bhnd,bhmd->bhnm', q, k) * scale
    attn = jax.nn.softmax(dots, axis=-1)
    out = jnp.einsum('bhnm,bhmd->bhnd', attn, v)
    out = out.transpose(0, 2, 1, 3).reshape(B, N, inner)
    return jnp.einsum('bne,ed->bnd', out, w_out)


if __name__ == "__main__":
    # Small shapes consistent with the module: batch=2, seq=8, dim=32,
    # heads=4, dim_head=16 -> inner_dim=64 (project_out=True), dropout=0.0.
    B, N, dim = 2, 8, 32
    heads, dim_head = 4, 16
    inner = heads * dim_head

    key = jax.random.PRNGKey(0)
    kx, kqkv, kout = jax.random.split(key, 3)
    x = jax.random.normal(kx, (B, N, dim), dtype=jnp.float32)
    # Weights stored as [in, out] = transpose of PyTorch nn.Linear's [out, in].
    w_qkv = jax.random.normal(kqkv, (dim, 3 * inner), dtype=jnp.float32) * 0.02
    w_out = jax.random.normal(kout, (inner, dim), dtype=jnp.float32) * 0.02

    y = attention_forward(x, w_qkv, w_out, heads=heads, dim_head=dim_head)
    y = jax.block_until_ready(y)

    y_ref = reference_forward(x, w_qkv, w_out, heads=heads, dim_head=dim_head)
    assert y.shape == (B, N, dim)
    # Slightly looser tolerance: approx reciprocal (EUP vrcp) in the finalize.
    assert jnp.allclose(y, y_ref, atol=1e-3, rtol=1e-3), (
        "mismatch vs reference, max abs diff = "
        f"{float(jnp.max(jnp.abs(y - y_ref)))}")

    print("KERNEL_OK")
</pallas_src>

<mosaic_0001>
module attributes {stable_mosaic.version = 11 : i64} {
  func.func @attention_kernel(%arg0: i32, %arg1: i32, %arg2: i32, %arg3: memref<1x8x32xf32, #tpu.memory_space<vmem>>, %arg4: memref<1x8x32xf32, #tpu.memory_space<vmem>>, %arg5: memref<32x64xf32, #tpu.memory_space<vmem>>, %arg6: memref<32x64xf32, #tpu.memory_space<vmem>>, %arg7: memref<32x64xf32, #tpu.memory_space<vmem>>, %arg8: memref<64x32xf32, #tpu.memory_space<vmem>>, %arg9: memref<1x8x32xf32, #tpu.memory_space<vmem>>, %arg10: memref<8x64xf32, #tpu.memory_space<vmem>>, %arg11: memref<4x8x1xf32, #tpu.memory_space<vmem>>, %arg12: memref<4x8x1xf32, #tpu.memory_space<vmem>>, %arg13: memref<8x64xf32, #tpu.memory_space<vmem>>) attributes {dimension_semantics = [#tpu.dimension_semantics<parallel>, #tpu.dimension_semantics<parallel>, #tpu.dimension_semantics<arbitrary>], iteration_bounds = array<i64: 2, 1, 1>, scalar_prefetch = 0 : i64, scratch_operands = 4 : i64, tpu.core_type = #tpu.core_type<tc>, window_params = [{transform_indices = @transform_0, window_bounds = array<i64: 1, 8, 32>}, {transform_indices = @transform_1, window_bounds = array<i64: 1, 8, 32>}, {pipeline_mode = #tpu.pipeline_mode<synchronous>, transform_indices = @transform_2, window_bounds = array<i64: 32, 64>}, {pipeline_mode = #tpu.pipeline_mode<synchronous>, transform_indices = @transform_3, window_bounds = array<i64: 32, 64>}, {pipeline_mode = #tpu.pipeline_mode<synchronous>, transform_indices = @transform_4, window_bounds = array<i64: 32, 64>}, {pipeline_mode = #tpu.pipeline_mode<synchronous>, transform_indices = @transform_5, window_bounds = array<i64: 64, 32>}, {transform_indices = @transform_6, window_bounds = array<i64: 1, 8, 32>}]} {
    %c0_i32 = arith.constant 0 : i32
    %0 = arith.cmpi eq, %arg2, %c0_i32 : i32
    %1 = arith.extui %0 : i1 to i32
    %c0_i32_0 = arith.constant 0 : i32
    %2 = arith.cmpi ne, %1, %c0_i32_0 : i32
    scf.if %2 {
      %c0_92 = arith.constant 0 : index
      %c0_93 = arith.constant 0 : index
      %c0_94 = arith.constant 0 : index
      %140 = vector.load %arg3[%c0_92, %c0_93, %c0_94] : memref<1x8x32xf32, #tpu.memory_space<vmem>>, vector<1x8x32xf32>
      %141 = vector.shape_cast %140 : vector<1x8x32xf32> to vector<8x32xf32>
      %c0_95 = arith.constant 0 : index
      %c0_96 = arith.constant 0 : index
      %142 = vector.load %arg5[%c0_95, %c0_96] : memref<32x64xf32, #tpu.memory_space<vmem>>, vector<32x64xf32>
      %cst_97 = arith.constant dense<0.000000e+00> : vector<8x64xf32>
      %143 = tpu.matmul %141, %142, %cst_97 {dimension_numbers = #tpu.dot_dimension_numbers<[1], [0], [0], [1], [0, 0, 1, 1], [], []>} : vector<8x32xf32>, vector<32x64xf32>, vector<8x64xf32> -> vector<8x64xf32>
      %cst_98 = arith.constant 2.500000e-01 : f32
      %144 = vector.broadcast %cst_98 : f32 to vector<8x64xf32>
      %145 = arith.mulf %143, %144 : vector<8x64xf32>
      %c0_99 = arith.constant 0 : index
      %c0_100 = arith.constant 0 : index
      %146 = vector.load %arg10[%c0_99, %c0_100] : memref<8x64xf32, #tpu.memory_space<vmem>>, vector<8x64xf32>
      tpu.vector_store %arg10[%c0_99, %c0_100], %145 {strides = array<i32>} : memref<8x64xf32, #tpu.memory_space<vmem>>, vector<8x64xf32>,
      %cst_101 = arith.constant 0xFF800000 : f32
      %147 = vector.broadcast %cst_101 : f32 to vector<4x8x1xf32>
      %c0_102 = arith.constant 0 : index
      %c0_103 = arith.constant 0 : index
      %c0_104 = arith.constant 0 : index
      %148 = vector.load %arg11[%c0_102, %c0_103, %c0_104] : memref<4x8x1xf32, #tpu.memory_space<vmem>>, vector<4x8x1xf32>
      tpu.vector_store %arg11[%c0_102, %c0_103, %c0_104], %147 {strides = array<i32>} : memref<4x8x1xf32, #tpu.memory_space<vmem>>, vector<4x8x1xf32>,
      %cst_105 = arith.constant 0.000000e+00 : f32
      %149 = vector.broadcast %cst_105 : f32 to vector<4x8x1xf32>
      %c0_106 = arith.constant 0 : index
      %c0_107 = arith.constant 0 : index
      %c0_108 = arith.constant 0 : index
      %150 = vector.load %arg12[%c0_106, %c0_107, %c0_108] : memref<4x8x1xf32, #tpu.memory_space<vmem>>, vector<4x8x1xf32>
      tpu.vector_store %arg12[%c0_106, %c0_107, %c0_108], %149 {strides = array<i32>} : memref<4x8x1xf32, #tpu.memory_space<vmem>>, vector<4x8x1xf32>,
      %cst_109 = arith.constant 0.000000e+00 : f32
      %151 = vector.broadcast %cst_109 : f32 to vector<8x64xf32>
      %c0_110 = arith.constant 0 : index
      %c0_111 = arith.constant 0 : index
      %152 = vector.load %arg13[%c0_110, %c0_111] : memref<8x64xf32, #tpu.memory_space<vmem>>, vector<8x64xf32>
      tpu.vector_store %arg13[%c0_110, %c0_111], %151 {strides = array<i32>} : memref<8x64xf32, #tpu.memory_space<vmem>>, vector<8x64xf32>,
    } else {
    }
    %c0 = arith.constant 0 : index
    %c0_1 = arith.constant 0 : index
    %c0_2 = arith.constant 0 : index
    %3 = vector.load %arg4[%c0, %c0_1, %c0_2] : memref<1x8x32xf32, #tpu.memory_space<vmem>>, vector<1x8x32xf32>
    %4 = vector.shape_cast %3 : vector<1x8x32xf32> to vector<8x32xf32>
    %c0_3 = arith.constant 0 : index
    %c0_4 = arith.constant 0 : index
    %5 = vector.load %arg6[%c0_3, %c0_4] : memref<32x64xf32, #tpu.memory_space<vmem>>, vector<32x64xf32>
    %cst = arith.constant dense<0.000000e+00> : vector<8x64xf32>
    %6 = tpu.matmul %4, %5, %cst {dimension_numbers = #tpu.dot_dimension_numbers<[1], [0], [0], [1], [0, 0, 1, 1], [], []>} : vector<8x32xf32>, vector<32x64xf32>, vector<8x64xf32> -> vector<8x64xf32>
    %c0_5 = arith.constant 0 : index
    %c0_6 = arith.constant 0 : index
    %7 = vector.load %arg7[%c0_5, %c0_6] : memref<32x64xf32, #tpu.memory_space<vmem>>, vector<32x64xf32>
    %cst_7 = arith.constant dense<0.000000e+00> : vector<8x64xf32>
    %8 = tpu.matmul %4, %7, %cst_7 {dimension_numbers = #tpu.dot_dimension_numbers<[1], [0], [0], [1], [0, 0, 1, 1], [], []>} : vector<8x32xf32>, vector<32x64xf32>, vector<8x64xf32> -> vector<8x64xf32>
    %c0_8 = arith.constant 0 : index
    %c0_9 = arith.constant 0 : index
    %9 = vector.load %arg10[%c0_8, %c0_9] : memref<8x64xf32, #tpu.memory_space<vmem>>, vector<8x16xf32>
    %10 = vector.extract_strided_slice %6 {offsets = [0, 0], sizes = [8, 16], strides = [1, 1]} : vector<8x64xf32> to vector<8x16xf32>
    %cst_10 = arith.constant dense<0.000000e+00> : vector<8x8xf32>
    %11 = tpu.matmul %9, %10, %cst_10 {dimension_numbers = #tpu.dot_dimension_numbers<[1], [1], [0], [0], [0, 0, 1, 0], [], []>} : vector<8x16xf32>, vector<8x16xf32>, vector<8x8xf32> -> vector<8x8xf32>
    %c0_11 = arith.constant 0 : index
    %c0_12 = arith.constant 0 : index
    %c0_13 = arith.constant 0 : index
    %12 = vector.load %arg11[%c0_11, %c0_12, %c0_13] : memref<4x8x1xf32, #tpu.memory_space<vmem>>, vector<1x8x1xf32>
    %13 = vector.shape_cast %12 : vector<1x8x1xf32> to vector<8x1xf32>
    %cst_14 = arith.constant dense<0xFF800000> : vector<8xf32>
    %14 = vector.multi_reduction <maximumf>, %11, %cst_14 [1] : vector<8x8xf32> to vector<8xf32>
    %15 = vector.shape_cast %14 : vector<8xf32> to vector<8x1xf32>
    %16 = arith.maximumf %13, %15 : vector<8x1xf32>
    %17 = arith.subf %13, %16 : vector<8x1xf32>
    %18 = math.exp %17 : vector<8x1xf32>
    %19 = vector.broadcast %16 : vector<8x1xf32> to vector<8x8xf32>
    %20 = arith.subf %11, %19 : vector<8x8xf32>
    %21 = math.exp %20 : vector<8x8xf32>
    %c0_15 = arith.constant 0 : index
    %c0_16 = arith.constant 0 : index
    %c0_17 = arith.constant 0 : index
    %22 = vector.load %arg12[%c0_15, %c0_16, %c0_17] : memref<4x8x1xf32, #tpu.memory_space<vmem>>, vector<1x8x1xf32>
    %23 = vector.shape_cast %22 : vector<1x8x1xf32> to vector<8x1xf32>
    %24 = arith.mulf %18, %23 : vector<8x1xf32>
    %cst_18 = arith.constant dense<0.000000e+00> : vector<8xf32>
    %25 = vector.multi_reduction <add>, %21, %cst_18 [1] : vector<8x8xf32> to vector<8xf32>
    %26 = vector.shape_cast %25 : vector<8xf32> to vector<8x1xf32>
    %27 = arith.addf %24, %26 : vector<8x1xf32>
    %c0_19 = arith.constant 0 : index
    %c0_20 = arith.constant 0 : index
    %c0_21 = arith.constant 0 : index
    %28 = vector.load %arg12[%c0_19, %c0_20, %c0_21] : memref<4x8x1xf32, #tpu.memory_space<vmem>>, vector<1x8x1xf32>
    %29 = vector.shape_cast %28 : vector<1x8x1xf32> to vector<8x1xf32>
    %30 = vector.shape_cast %27 : vector<8x1xf32> to vector<1x8x1xf32>
    tpu.vector_store %arg12[%c0_19, %c0_20, %c0_21], %30 {strides = array<i32>} : memref<4x8x1xf32, #tpu.memory_space<vmem>>, vector<1x8x1xf32>,
    %c0_22 = arith.constant 0 : index
    %c0_23 = arith.constant 0 : index
    %31 = vector.load %arg13[%c0_22, %c0_23] : memref<8x64xf32, #tpu.memory_space<vmem>>, vector<8x16xf32>
    %32 = vector.broadcast %18 : vector<8x1xf32> to vector<8x16xf32>
    %33 = arith.mulf %32, %31 : vector<8x16xf32>
    %34 = vector.extract_strided_slice %8 {offsets = [0, 0], sizes = [8, 16], strides = [1, 1]} : vector<8x64xf32> to vector<8x16xf32>
    %cst_24 = arith.constant dense<0.000000e+00> : vector<8x16xf32>
    %35 = tpu.matmul %21, %34, %cst_24 {dimension_numbers = #tpu.dot_dimension_numbers<[1], [0], [0], [1], [0, 0, 1, 1], [], []>} : vector<8x8xf32>, vector<8x16xf32>, vector<8x16xf32> -> vector<8x16xf32>
    %36 = arith.addf %33, %35 : vector<8x16xf32>
    %c0_25 = arith.constant 0 : index
    %c0_26 = arith.constant 0 : index
    %37 = vector.load %arg13[%c0_25, %c0_26] : memref<8x64xf32, #tpu.memory_space<vmem>>, vector<8x16xf32>
    tpu.vector_store %arg13[%c0_25, %c0_26], %36 {strides = array<i32>} : memref<8x64xf32, #tpu.memory_space<vmem>>, vector<8x16xf32>,
    %c0_27 = arith.constant 0 : index
    %c0_28 = arith.constant 0 : index
    %c0_29 = arith.constant 0 : index
    %38 = vector.load %arg11[%c0_27, %c0_28, %c0_29] : memref<4x8x1xf32, #tpu.memory_space<vmem>>, vector<1x8x1xf32>
    %39 = vector.shape_cast %38 : vector<1x8x1xf32> to vector<8x1xf32>
    %40 = vector.shape_cast %16 : vector<8x1xf32> to vector<1x8x1xf32>
    tpu.vector_store %arg11[%c0_27, %c0_28, %c0_29], %40 {strides = array<i32>} : memref<4x8x1xf32, #tpu.memory_space<vmem>>, vector<1x8x1xf32>,
    %c0_30 = arith.constant 0 : index
    %c16 = arith.constant 16 : index
    %41 = vector.load %arg10[%c0_30, %c16] : memref<8x64xf32, #tpu.memory_space<vmem>>, vector<8x16xf32>
    %42 = vector.extract_strided_slice %6 {offsets = [0, 16], sizes = [8, 16], strides = [1, 1]} : vector<8x64xf32> to vector<8x16xf32>
    %cst_31 = arith.constant dense<0.000000e+00> : vector<8x8xf32>
    %43 = tpu.matmul %41, %42, %cst_31 {dimension_numbers = #tpu.dot_dimension_numbers<[1], [1], [0], [0], [0, 0, 1, 0], [], []>} : vector<8x16xf32>, vector<8x16xf32>, vector<8x8xf32> -> vector<8x8xf32>
    %c1 = arith.constant 1 : index
    %c0_32 = arith.constant 0 : index
    %c0_33 = arith.constant 0 : index
    %44 = vector.load %arg11[%c1, %c0_32, %c0_33] : memref<4x8x1xf32, #tpu.memory_space<vmem>>, vector<1x8x1xf32>
    %45 = vector.shape_cast %44 : vector<1x8x1xf32> to vector<8x1xf32>
    %cst_34 = arith.constant dense<0xFF800000> : vector<8xf32>
    %46 = vector.multi_reduction <maximumf>, %43, %cst_34 [1] : vector<8x8xf32> to vector<8xf32>
    %47 = vector.shape_cast %46 : vector<8xf32> to vector<8x1xf32>
    %48 = arith.maximumf %45, %47 : vector<8x1xf32>
    %49 = arith.subf %45, %48 : vector<8x1xf32>
    %50 = math.exp %49 : vector<8x1xf32>
    %51 = vector.broadcast %48 : vector<8x1xf32> to vector<8x8xf32>
    %52 = arith.subf %43, %51 : vector<8x8xf32>
    %53 = math.exp %52 : vector<8x8xf32>
    %c1_35 = arith.constant 1 : index
    %c0_36 = arith.constant 0 : index
    %c0_37 = arith.constant 0 : index
    %54 = vector.load %arg12[%c1_35, %c0_36, %c0_37] : memref<4x8x1xf32, #tpu.memory_space<vmem>>, vector<1x8x1xf32>
    %55 = vector.shape_cast %54 : vector<1x8x1xf32> to vector<8x1xf32>
    %56 = arith.mulf %50, %55 : vector<8x1xf32>
    %cst_38 = arith.constant dense<0.000000e+00> : vector<8xf32>
    %57 = vector.multi_reduction <add>, %53, %cst_38 [1] : vector<8x8xf32> to vector<8xf32>
    %58 = vector.shape_cast %57 : vector<8xf32> to vector<8x1xf32>
    %59 = arith.addf %56, %58 : vector<8x1xf32>
    %c1_39 = arith.constant 1 : index
    %c0_40 = arith.constant 0 : index
    %c0_41 = arith.constant 0 : index
    %60 = vector.load %arg12[%c1_39, %c0_40, %c0_41] : memref<4x8x1xf32, #tpu.memory_space<vmem>>, vector<1x8x1xf32>
    %61 = vector.shape_cast %60 : vector<1x8x1xf32> to vector<8x1xf32>
    %62 = vector.shape_cast %59 : vector<8x1xf32> to vector<1x8x1xf32>
    tpu.vector_store %arg12[%c1_39, %c0_40, %c0_41], %62 {strides = array<i32>} : memref<4x8x1xf32, #tpu.memory_space<vmem>>, vector<1x8x1xf32>,
    %c0_42 = arith.constant 0 : index
    %c16_43 = arith.constant 16 : index
    %63 = vector.load %arg13[%c0_42, %c16_43] : memref<8x64xf32, #tpu.memory_space<vmem>>, vector<8x16xf32>
    %64 = vector.broadcast %50 : vector<8x1xf32> to vector<8x16xf32>
    %65 = arith.mulf %64, %63 : vector<8x16xf32>
    %66 = vector.extract_strided_slice %8 {offsets = [0, 16], sizes = [8, 16], strides = [1, 1]} : vector<8x64xf32> to vector<8x16xf32>
    %cst_44 = arith.constant dense<0.000000e+00> : vector<8x16xf32>
    %67 = tpu.matmul %53, %66, %cst_44 {dimension_numbers = #tpu.dot_dimension_numbers<[1], [0], [0], [1], [0, 0, 1, 1], [], []>} : vector<8x8xf32>, vector<8x16xf32>, vector<8x16xf32> -> vector<8x16xf32>
    %68 = arith.addf %65, %67 : vector<8x16xf32>
    %c0_45 = arith.constant 0 : index
    %c16_46 = arith.constant 16 : index
    %69 = vector.load %arg13[%c0_45, %c16_46] : memref<8x64xf32, #tpu.memory_space<vmem>>, vector<8x16xf32>
    tpu.vector_store %arg13[%c0_45, %c16_46], %68 {strides = array<i32>} : memref<8x64xf32, #tpu.memory_space<vmem>>, vector<8x16xf32>,
    %c1_47 = arith.constant 1 : index
    %c0_48 = arith.constant 0 : index
    %c0_49 = arith.constant 0 : index
    %70 = vector.load %arg11[%c1_47, %c0_48, %c0_49] : memref<4x8x1xf32, #tpu.memory_space<vmem>>, vector<1x8x1xf32>
    %71 = vector.shape_cast %70 : vector<1x8x1xf32> to vector<8x1xf32>
    %72 = vector.shape_cast %48 : vector<8x1xf32> to vector<1x8x1xf32>
    tpu.vector_store %arg11[%c1_47, %c0_48, %c0_49], %72 {strides = array<i32>} : memref<4x8x1xf32, #tpu.memory_space<vmem>>, vector<1x8x1xf32>,
    %c0_50 = arith.constant 0 : index
    %c32 = arith.constant 32 : index
    %73 = vector.load %arg10[%c0_50, %c32] : memref<8x64xf32, #tpu.memory_space<vmem>>, vector<8x16xf32>
    %74 = vector.extract_strided_slice %6 {offsets = [0, 32], sizes = [8, 16], strides = [1, 1]} : vector<8x64xf32> to vector<8x16xf32>
    %cst_51 = arith.constant dense<0.000000e+00> : vector<8x8xf32>
    %75 = tpu.matmul %73, %74, %cst_51 {dimension_numbers = #tpu.dot_dimension_numbers<[1], [1], [0], [0], [0, 0, 1, 0], [], []>} : vector<8x16xf32>, vector<8x16xf32>, vector<8x8xf32> -> vector<8x8xf32>
    %c2 = arith.constant 2 : index
    %c0_52 = arith.constant 0 : index
    %c0_53 = arith.constant 0 : index
    %76 = vector.load %arg11[%c2, %c0_52, %c0_53] : memref<4x8x1xf32, #tpu.memory_space<vmem>>, vector<1x8x1xf32>
    %77 = vector.shape_cast %76 : vector<1x8x1xf32> to vector<8x1xf32>
    %cst_54 = arith.constant dense<0xFF800000> : vector<8xf32>
    %78 = vector.multi_reduction <maximumf>, %75, %cst_54 [1] : vector<8x8xf32> to vector<8xf32>
    %79 = vector.shape_cast %78 : vector<8xf32> to vector<8x1xf32>
    %80 = arith.maximumf %77, %79 : vector<8x1xf32>
    %81 = arith.subf %77, %80 : vector<8x1xf32>
    %82 = math.exp %81 : vector<8x1xf32>
    %83 = vector.broadcast %80 : vector<8x1xf32> to vector<8x8xf32>
    %84 = arith.subf %75, %83 : vector<8x8xf32>
    %85 = math.exp %84 : vector<8x8xf32>
    %c2_55 = arith.constant 2 : index
    %c0_56 = arith.constant 0 : index
    %c0_57 = arith.constant 0 : index
    %86 = vector.load %arg12[%c2_55, %c0_56, %c0_57] : memref<4x8x1xf32, #tpu.memory_space<vmem>>, vector<1x8x1xf32>
    %87 = vector.shape_cast %86 : vector<1x8x1xf32> to vector<8x1xf32>
    %88 = arith.mulf %82, %87 : vector<8x1xf32>
    %cst_58 = arith.constant dense<0.000000e+00> : vector<8xf32>
    %89 = vector.multi_reduction <add>, %85, %cst_58 [1] : vector<8x8xf32> to vector<8xf32>
    %90 = vector.shape_cast %89 : vector<8xf32> to vector<8x1xf32>
    %91 = arith.addf %88, %90 : vector<8x1xf32>
    %c2_59 = arith.constant 2 : index
    %c0_60 = arith.constant 0 : index
    %c0_61 = arith.constant 0 : index
    %92 = vector.load %arg12[%c2_59, %c0_60, %c0_61] : memref<4x8x1xf32, #tpu.memory_space<vmem>>, vector<1x8x1xf32>
    %93 = vector.shape_cast %92 : vector<1x8x1xf32> to vector<8x1xf32>
    %94 = vector.shape_cast %91 : vector<8x1xf32> to vector<1x8x1xf32>
    tpu.vector_store %arg12[%c2_59, %c0_60, %c0_61], %94 {strides = array<i32>} : memref<4x8x1xf32, #tpu.memory_space<vmem>>, vector<1x8x1xf32>,
    %c0_62 = arith.constant 0 : index
    %c32_63 = arith.constant 32 : index
    %95 = vector.load %arg13[%c0_62, %c32_63] : memref<8x64xf32, #tpu.memory_space<vmem>>, vector<8x16xf32>
    %96 = vector.broadcast %82 : vector<8x1xf32> to vector<8x16xf32>
    %97 = arith.mulf %96, %95 : vector<8x16xf32>
    %98 = vector.extract_strided_slice %8 {offsets = [0, 32], sizes = [8, 16], strides = [1, 1]} : vector<8x64xf32> to vector<8x16xf32>
    %cst_64 = arith.constant dense<0.000000e+00> : vector<8x16xf32>
    %99 = tpu.matmul %85, %98, %cst_64 {dimension_numbers = #tpu.dot_dimension_numbers<[1], [0], [0], [1], [0, 0, 1, 1], [], []>} : vector<8x8xf32>, vector<8x16xf32>, vector<8x16xf32> -> vector<8x16xf32>
    %100 = arith.addf %97, %99 : vector<8x16xf32>
    %c0_65 = arith.constant 0 : index
    %c32_66 = arith.constant 32 : index
    %101 = vector.load %arg13[%c0_65, %c32_66] : memref<8x64xf32, #tpu.memory_space<vmem>>, vector<8x16xf32>
    tpu.vector_store %arg13[%c0_65, %c32_66], %100 {strides = array<i32>} : memref<8x64xf32, #tpu.memory_space<vmem>>, vector<8x16xf32>,
    %c2_67 = arith.constant 2 : index
    %c0_68 = arith.constant 0 : index
    %c0_69 = arith.constant 0 : index
    %102 = vector.load %arg11[%c2_67, %c0_68, %c0_69] : memref<4x8x1xf32, #tpu.memory_space<vmem>>, vector<1x8x1xf32>
    %103 = vector.shape_cast %102 : vector<1x8x1xf32> to vector<8x1xf32>
    %104 = vector.shape_cast %80 : vector<8x1xf32> to vector<1x8x1xf32>
    tpu.vector_store %arg11[%c2_67, %c0_68, %c0_69], %104 {strides = array<i32>} : memref<4x8x1xf32, #tpu.memory_space<vmem>>, vector<1x8x1xf32>,
    %c0_70 = arith.constant 0 : index
    %c48 = arith.constant 48 : index
    %105 = vector.load %arg10[%c0_70, %c48] : memref<8x64xf32, #tpu.memory_space<vmem>>, vector<8x16xf32>
    %106 = vector.extract_strided_slice %6 {offsets = [0, 48], sizes = [8, 16], strides = [1, 1]} : vector<8x64xf32> to vector<8x16xf32>
    %cst_71 = arith.constant dense<0.000000e+00> : vector<8x8xf32>
    %107 = tpu.matmul %105, %106, %cst_71 {dimension_numbers = #tpu.dot_dimension_numbers<[1], [1], [0], [0], [0, 0, 1, 0], [], []>} : vector<8x16xf32>, vector<8x16xf32>, vector<8x8xf32> -> vector<8x8xf32>
    %c3 = arith.constant 3 : index
    %c0_72 = arith.constant 0 : index
    %c0_73 = arith.constant 0 : index
    %108 = vector.load %arg11[%c3, %c0_72, %c0_73] : memref<4x8x1xf32, #tpu.memory_space<vmem>>, vector<1x8x1xf32>
    %109 = vector.shape_cast %108 : vector<1x8x1xf32> to vector<8x1xf32>
    %cst_74 = arith.constant dense<0xFF800000> : vector<8xf32>
    %110 = vector.multi_reduction <maximumf>, %107, %cst_74 [1] : vector<8x8xf32> to vector<8xf32>
    %111 = vector.shape_cast %110 : vector<8xf32> to vector<8x1xf32>
    %112 = arith.maximumf %109, %111 : vector<8x1xf32>
    %113 = arith.subf %109, %112 : vector<8x1xf32>
    %114 = math.exp %113 : vector<8x1xf32>
    %115 = vector.broadcast %112 : vector<8x1xf32> to vector<8x8xf32>
    %116 = arith.subf %107, %115 : vector<8x8xf32>
    %117 = math.exp %116 : vector<8x8xf32>
    %c3_75 = arith.constant 3 : index
    %c0_76 = arith.constant 0 : index
    %c0_77 = arith.constant 0 : index
    %118 = vector.load %arg12[%c3_75, %c0_76, %c0_77] : memref<4x8x1xf32, #tpu.memory_space<vmem>>, vector<1x8x1xf32>
    %119 = vector.shape_cast %118 : vector<1x8x1xf32> to vector<8x1xf32>
    %120 = arith.mulf %114, %119 : vector<8x1xf32>
    %cst_78 = arith.constant dense<0.000000e+00> : vector<8xf32>
    %121 = vector.multi_reduction <add>, %117, %cst_78 [1] : vector<8x8xf32> to vector<8xf32>
    %122 = vector.shape_cast %121 : vector<8xf32> to vector<8x1xf32>
    %123 = arith.addf %120, %122 : vector<8x1xf32>
    %c3_79 = arith.constant 3 : index
    %c0_80 = arith.constant 0 : index
    %c0_81 = arith.constant 0 : index
    %124 = vector.load %arg12[%c3_79, %c0_80, %c0_81] : memref<4x8x1xf32, #tpu.memory_space<vmem>>, vector<1x8x1xf32>
    %125 = vector.shape_cast %124 : vector<1x8x1xf32> to vector<8x1xf32>
    %126 = vector.shape_cast %123 : vector<8x1xf32> to vector<1x8x1xf32>
    tpu.vector_store %arg12[%c3_79, %c0_80, %c0_81], %126 {strides = array<i32>} : memref<4x8x1xf32, #tpu.memory_space<vmem>>, vector<1x8x1xf32>,
    %c0_82 = arith.constant 0 : index
    %c48_83 = arith.constant 48 : index
    %127 = vector.load %arg13[%c0_82, %c48_83] : memref<8x64xf32, #tpu.memory_space<vmem>>, vector<8x16xf32>
    %128 = vector.broadcast %114 : vector<8x1xf32> to vector<8x16xf32>
    %129 = arith.mulf %128, %127 : vector<8x16xf32>
    %130 = vector.extract_strided_slice %8 {offsets = [0, 48], sizes = [8, 16], strides = [1, 1]} : vector<8x64xf32> to vector<8x16xf32>
    %cst_84 = arith.constant dense<0.000000e+00> : vector<8x16xf32>
    %131 = tpu.matmul %117, %130, %cst_84 {dimension_numbers = #tpu.dot_dimension_numbers<[1], [0], [0], [1], [0, 0, 1, 1], [], []>} : vector<8x8xf32>, vector<8x16xf32>, vector<8x16xf32> -> vector<8x16xf32>
    %132 = arith.addf %129, %131 : vector<8x16xf32>
    %c0_85 = arith.constant 0 : index
    %c48_86 = arith.constant 48 : index
    %133 = vector.load %arg13[%c0_85, %c48_86] : memref<8x64xf32, #tpu.memory_space<vmem>>, vector<8x16xf32>
    tpu.vector_store %arg13[%c0_85, %c48_86], %132 {strides = array<i32>} : memref<8x64xf32, #tpu.memory_space<vmem>>, vector<8x16xf32>,
    %c3_87 = arith.constant 3 : index
    %c0_88 = arith.constant 0 : index
    %c0_89 = arith.constant 0 : index
    %134 = vector.load %arg11[%c3_87, %c0_88, %c0_89] : memref<4x8x1xf32, #tpu.memory_space<vmem>>, vector<1x8x1xf32>
    %135 = vector.shape_cast %134 : vector<1x8x1xf32> to vector<8x1xf32>
    %136 = vector.shape_cast %112 : vector<8x1xf32> to vector<1x8x1xf32>
    tpu.vector_store %arg11[%c3_87, %c0_88, %c0_89], %136 {strides = array<i32>} : memref<4x8x1xf32, #tpu.memory_space<vmem>>, vector<1x8x1xf32>,
    %c0_i32_90 = arith.constant 0 : i32
    %137 = arith.cmpi eq, %arg2, %c0_i32_90 : i32
    %138 = arith.extui %137 : i1 to i32
    %c0_i32_91 = arith.constant 0 : i32
    %139 = arith.cmpi ne, %138, %c0_i32_91 : i32
    scf.if %139 {
      %c0_92 = arith.constant 0 : index
      %c0_93 = arith.constant 0 : index
      %140 = vector.load %arg13[%c0_92, %c0_93] : memref<8x64xf32, #tpu.memory_space<vmem>>, vector<8x16xf32>
      %c0_94 = arith.constant 0 : index
      %c0_95 = arith.constant 0 : index
      %c0_96 = arith.constant 0 : index
      %141 = vector.load %arg12[%c0_94, %c0_95, %c0_96] : memref<4x8x1xf32, #tpu.memory_space<vmem>>, vector<1x8x1xf32>
      %142 = vector.shape_cast %141 : vector<1x8x1xf32> to vector<8x1xf32>
      %143 = tpu.reciprocal %142 {approx = true} : vector<8x1xf32> -> vector<8x1xf32>
      %144 = vector.broadcast %143 : vector<8x1xf32> to vector<8x16xf32>
      %145 = arith.mulf %140, %144 : vector<8x16xf32>
      %c0_97 = arith.constant 0 : index
      %c0_98 = arith.constant 0 : index
      %146 = vector.load %arg13[%c0_97, %c0_98] : memref<8x64xf32, #tpu.memory_space<vmem>>, vector<8x16xf32>
      tpu.vector_store %arg13[%c0_97, %c0_98], %145 {strides = array<i32>} : memref<8x64xf32, #tpu.memory_space<vmem>>, vector<8x16xf32>,
      %c0_99 = arith.constant 0 : index
      %c16_100 = arith.constant 16 : index
      %147 = vector.load %arg13[%c0_99, %c16_100] : memref<8x64xf32, #tpu.memory_space<vmem>>, vector<8x16xf32>
      %c1_101 = arith.constant 1 : index
      %c0_102 = arith.constant 0 : index
      %c0_103 = arith.constant 0 : index
      %148 = vector.load %arg12[%c1_101, %c0_102, %c0_103] : memref<4x8x1xf32, #tpu.memory_space<vmem>>, vector<1x8x1xf32>
      %149 = vector.shape_cast %148 : vector<1x8x1xf32> to vector<8x1xf32>
      %150 = tpu.reciprocal %149 {approx = true} : vector<8x1xf32> -> vector<8x1xf32>
      %151 = vector.broadcast %150 : vector<8x1xf32> to vector<8x16xf32>
      %152 = arith.mulf %147, %151 : vector<8x16xf32>
      %c0_104 = arith.constant 0 : index
      %c16_105 = arith.constant 16 : index
      %153 = vector.load %arg13[%c0_104, %c16_105] : memref<8x64xf32, #tpu.memory_space<vmem>>, vector<8x16xf32>
      tpu.vector_store %arg13[%c0_104, %c16_105], %152 {strides = array<i32>} : memref<8x64xf32, #tpu.memory_space<vmem>>, vector<8x16xf32>,
      %c0_106 = arith.constant 0 : index
      %c32_107 = arith.constant 32 : index
      %154 = vector.load %arg13[%c0_106, %c32_107] : memref<8x64xf32, #tpu.memory_space<vmem>>, vector<8x16xf32>
      %c2_108 = arith.constant 2 : index
      %c0_109 = arith.constant 0 : index
      %c0_110 = arith.constant 0 : index
      %155 = vector.load %arg12[%c2_108, %c0_109, %c0_110] : memref<4x8x1xf32, #tpu.memory_space<vmem>>, vector<1x8x1xf32>
      %156 = vector.shape_cast %155 : vector<1x8x1xf32> to vector<8x1xf32>
      %157 = tpu.reciprocal %156 {approx = true} : vector<8x1xf32> -> vector<8x1xf32>
      %158 = vector.broadcast %157 : vector<8x1xf32> to vector<8x16xf32>
      %159 = arith.mulf %154, %158 : vector<8x16xf32>
      %c0_111 = arith.constant 0 : index
      %c32_112 = arith.constant 32 : index
      %160 = vector.load %arg13[%c0_111, %c32_112] : memref<8x64xf32, #tpu.memory_space<vmem>>, vector<8x16xf32>
      tpu.vector_store %arg13[%c0_111, %c32_112], %159 {strides = array<i32>} : memref<8x64xf32, #tpu.memory_space<vmem>>, vector<8x16xf32>,
      %c0_113 = arith.constant 0 : index
      %c48_114 = arith.constant 48 : index
      %161 = vector.load %arg13[%c0_113, %c48_114] : memref<8x64xf32, #tpu.memory_space<vmem>>, vector<8x16xf32>
      %c3_115 = arith.constant 3 : index
      %c0_116 = arith.constant 0 : index
      %c0_117 = arith.constant 0 : index
      %162 = vector.load %arg12[%c3_115, %c0_116, %c0_117] : memref<4x8x1xf32, #tpu.memory_space<vmem>>, vector<1x8x1xf32>
      %163 = vector.shape_cast %162 : vector<1x8x1xf32> to vector<8x1xf32>
      %164 = tpu.reciprocal %163 {approx = true} : vector<8x1xf32> -> vector<8x1xf32>
      %165 = vector.broadcast %164 : vector<8x1xf32> to vector<8x16xf32>
      %166 = arith.mulf %161, %165 : vector<8x16xf32>
      %c0_118 = arith.constant 0 : index
      %c48_119 = arith.constant 48 : index
      %167 = vector.load %arg13[%c0_118, %c48_119] : memref<8x64xf32, #tpu.memory_space<vmem>>, vector<8x16xf32>
      tpu.vector_store %arg13[%c0_118, %c48_119], %166 {strides = array<i32>} : memref<8x64xf32, #tpu.memory_space<vmem>>, vector<8x16xf32>,
      %c0_120 = arith.constant 0 : index
      %c0_121 = arith.constant 0 : index
      %168 = vector.load %arg13[%c0_120, %c0_121] : memref<8x64xf32, #tpu.memory_space<vmem>>, vector<8x64xf32>
      %c0_122 = arith.constant 0 : index
      %c0_123 = arith.constant 0 : index
      %169 = vector.load %arg8[%c0_122, %c0_123] : memref<64x32xf32, #tpu.memory_space<vmem>>, vector<64x32xf32>
      %cst_124 = arith.constant dense<0.000000e+00> : vector<8x32xf32>
      %170 = tpu.matmul %168, %169, %cst_124 {dimension_numbers = #tpu.dot_dimension_numbers<[1], [0], [0], [1], [0, 0, 1, 1], [], []>} : vector<8x64xf32>, vector<64x32xf32>, vector<8x32xf32> -> vector<8x32xf32>
      %c0_125 = arith.constant 0 : index
      %c0_126 = arith.constant 0 : index
      %c0_127 = arith.constant 0 : index
      %171 = vector.load %arg9[%c0_125, %c0_126, %c0_127] : memref<1x8x32xf32, #tpu.memory_space<vmem>>, vector<1x8x32xf32>
      %172 = vector.shape_cast %171 : vector<1x8x32xf32> to vector<8x32xf32>
      %173 = vector.shape_cast %170 : vector<8x32xf32> to vector<1x8x32xf32>
      tpu.vector_store %arg9[%c0_125, %c0_126, %c0_127], %173 {strides = array<i32>} : memref<1x8x32xf32, #tpu.memory_space<vmem>>, vector<1x8x32xf32>,
    } else {
    }
    return
  }
  func.func @transform_0(%arg0: i32, %arg1: i32, %arg2: i32) -> (i32, i32, i32) {
    %c0_i32 = arith.constant 0 : i32
    %c0_i32_0 = arith.constant 0 : i32
    return %arg0, %arg1, %c0_i32 : i32, i32, i32
  }
  func.func @transform_1(%arg0: i32, %arg1: i32, %arg2: i32) -> (i32, i32, i32) {
    %c0_i32 = arith.constant 0 : i32
    %c0_i32_0 = arith.constant 0 : i32
    return %arg0, %arg2, %c0_i32 : i32, i32, i32
  }
  func.func @transform_2(%arg0: i32, %arg1: i32, %arg2: i32) -> (i32, i32) {
    %c0_i32 = arith.constant 0 : i32
    %c0_i32_0 = arith.constant 0 : i32
    %c0_i32_1 = arith.constant 0 : i32
    return %c0_i32, %c0_i32_0 : i32, i32
  }
  func.func @transform_3(%arg0: i32, %arg1: i32, %arg2: i32) -> (i32, i32) {
    %c0_i32 = arith.constant 0 : i32
    %c0_i32_0 = arith.constant 0 : i32
    %c0_i32_1 = arith.constant 0 : i32
    return %c0_i32, %c0_i32_0 : i32, i32
  }
  func.func @transform_4(%arg0: i32, %arg1: i32, %arg2: i32) -> (i32, i32) {
    %c0_i32 = arith.constant 0 : i32
    %c0_i32_0 = arith.constant 0 : i32
    %c0_i32_1 = arith.constant 0 : i32
    return %c0_i32, %c0_i32_0 : i32, i32
  }
  func.func @transform_5(%arg0: i32, %arg1: i32, %arg2: i32) -> (i32, i32) {
    %c0_i32 = arith.constant 0 : i32
    %c0_i32_0 = arith.constant 0 : i32
    %c0_i32_1 = arith.constant 0 : i32
    return %c0_i32, %c0_i32_0 : i32, i32
  }
  func.func @transform_6(%arg0: i32, %arg1: i32, %arg2: i32) -> (i32, i32, i32) {
    %c0_i32 = arith.constant 0 : i32
    %c0_i32_0 = arith.constant 0 : i32
    return %arg0, %arg1, %c0_i32 : i32, i32, i32
  }
}

</mosaic_0001>

<llo_original>
// kernel: attention_forward.1
$region0: #{attention_forward.1}
  #allocation0 [shape = 'u32[]', space=smem, size = 0x4, offset = 0x4, fixed_abs, tag = 'smem constant byte address 0x4 - core index']
  #allocation1 [shape = 'u32[144,128]{1,0:T(1,128)}', space=vmem, size = 0x12000, scoped, tag = 'internal scratch']
  #allocation2 [shape = 'f32[8,64]{1,0:T(8,128)}', space=vmem, size = 0x1000, scoped, tag = 'scratch operand']
  #allocation3 [shape = 'f32[4,8,1]{2,1,0:T(8,128)}', space=vmem, size = 0x4000, scoped, tag = 'scratch operand']
  #allocation4 [shape = 'f32[4,8,1]{2,1,0:T(8,128)}', space=vmem, size = 0x4000, scoped, tag = 'scratch operand']
  #allocation5 [shape = 'f32[8,64]{1,0:T(8,128)}', space=vmem, size = 0x1000, scoped, tag = 'scratch operand']
  %s0 = inlined_call_operand.vmem [shape: f32[2,8,32], index: 0, kind: input, shape index: {}, may-alias: {0,1}]
  %s1 = inlined_call_operand.vmem [shape: f32[2,8,32], index: 1, kind: input, shape index: {}, may-alias: {0,1}]
  %s2 = inlined_call_operand.vmem [shape: f32[32,64], index: 2, kind: input, shape index: {}]
  %s3 = inlined_call_operand.vmem [shape: f32[32,64], index: 3, kind: input, shape index: {}]
  %s4 = inlined_call_operand.vmem [shape: f32[32,64], index: 4, kind: input, shape index: {}]
  %s5 = inlined_call_operand.vmem [shape: f32[64,32], index: 5, kind: input, shape index: {}]
  %s6 = inlined_call_operand.hbm [shape: f32[2,8,32], index: 6, kind: output, shape index: {}]
  %s7 = sld [smem:[#allocation0]]
  $region65: #{attention_forward.1} parent=0
    _
  %s9 = ssub.s32 1, %s7
  %s10 = scalar_select 0, %s9, %s7
  $region1: #{attention_forward.1} parent=0
    #allocation6 [shape = 'u8[8192]{0}', space=vmem, size = 0x2000, scoped, tag = 'output window, operand 0']
    #allocation7 [shape = 's32[2]{0}', space=sflag, size = 0x8, scoped, tag = 'scoped memory for attention_forward.1']
    %11 = vsyncpa [#allocation7], 0
    %s12 = scalar_lea.sflag [#allocation7], 1
    %13 = vsyncpa %s12, 0
    loop: start=0, step=1, limit=4
    $region2: #{attention_forward.1} parent=1 // loop_pre_header
      _
    $region3: #{attention_forward.1} parent=1 // loop_header
      %s15 = sphi 0, %s19
      %p16 = scmp.ge.s32.totalorder %s15, 4
      %s22 = sphi 0, %s41
      %s23 = sphi 0, %s37
      %s24 = sphi 0, %s33
      %s25 = sphi 0, %s22
      %s26 = sphi 0, %s23
      %s27 = sphi 0, %s24
      %s28 = sphi 0, %s25
      %s29 = sphi 0, %s26
      %s30 = sphi 0, %s27
      %s46 = sphi 0, %s48
      %s49 = sphi 0, %s46
      %s50 = sphi 0, %s49
      %s66 = sphi 0, %s50
      %s74 = sphi 0, %s76
      %s77 = sphi 0, %s74
      %s78 = sphi 0, %s77
      %s94 = sphi 0, %s78
      %s98 = sphi 0, %s98
      %s100 = sphi 0, %s98
      %s101 = sphi 0, %s100
      %s115 = sphi 0, %s101
      %s119 = sphi 0, %s119
      %s121 = sphi 0, %s119
      %s122 = sphi 0, %s121
      %s136 = sphi 0, %s122
      %s140 = sphi 0, %s140
      %s142 = sphi 0, %s140
      %s143 = sphi 0, %s142
      %s157 = sphi 0, %s143
      %s161 = sphi 0, %s161
      %s163 = sphi 0, %s161
      %s164 = sphi 0, %s163
      %s178 = sphi 0, %s164
      %s186 = sphi 0, %s188
      %s189 = sphi 0, %s186
      %s190 = sphi 0, %s189
      %s206 = sphi 0, %s190
    $region4: #{attention_forward.1} parent=1 // loop_header_branch
      %18 = sbr.rel (%p16) target = $region8
    $region5: #{attention_forward.1} parent=1 // loop_body
      %s20 = ssub.s32 %s15, 1
      %s21 = ssub.s32 %s15, 2
      %s31 = sadd.s32 1, %s24
      %p32 = scmp.ge.s32.totalorder %s31, 1
      %s33 = scalar_select %p32, 0, %s31
      %s34 = sadd.s32 1, %s23
      %s35 = scalar_select %p32, %s34, %s23
      %p36 = scmp.ge.s32.totalorder %s35, 1
      %s37 = scalar_select %p36, 0, %s35
      %s38 = sadd.s32 1, %s22
      %s39 = scalar_select %p36, %s38, %s22
      %p40 = scmp.ge.s32.totalorder %s39, 2
      %s41 = scalar_select %p40, 0, %s39
      %s42 = ssub.s32 %s22, %s41
      %s43 = ssub.s32 %s23, %s37
      %s44 = sor.u32 %s42, %s43
      %p45 = scmp.eq.s32.totalorder %s44, 0
      %s47 = sadd.s32 %s46, 1
      %s48 = scalar_select %p45, %s46, %s47
      %p51 = pneg %p45
      %p52 = scmp.eq.s32.totalorder %s15, 1
      %p53 = por %p51, %p52
      %p54 = scmp.ne.s32.totalorder %s46, %s49
      %p55 = scmp.eq.s32.totalorder %s15, 0
      %p56 = por %p54, %p55
      %p57 = scmp.ne.s32.totalorder %s46, %s49
      %p58 = scmp.eq.s32.totalorder %s20, 1
      %p59 = por %p57, %p58
      %p60 = scmp.ne.s32.totalorder %s49, %s50
      %p61 = scmp.eq.s32.totalorder %s20, 0
      %p62 = por %p60, %p61
      %p63 = scmp.ne.s32.totalorder %s49, %s50
      %p64 = scmp.eq.s32.totalorder %s21, 1
      %p65 = por %p63, %p64
      %p67 = scmp.ne.s32.totalorder %s50, %s66
      %p68 = scmp.eq.s32.totalorder %s21, 0
      %p69 = por %p67, %p68
      %s70 = ssub.s32 %s22, %s41
      %s71 = ssub.s32 %s24, %s33
      %s72 = sor.u32 %s70, %s71
      %p73 = scmp.eq.s32.totalorder %s72, 0
      %s75 = sadd.s32 %s74, 1
      %s76 = scalar_select %p73, %s74, %s75
      %p79 = pneg %p73
      %p80 = scmp.eq.s32.totalorder %s15, 1
      %p81 = por %p79, %p80
      %p82 = scmp.ne.s32.totalorder %s74, %s77
      %p83 = scmp.eq.s32.totalorder %s15, 0
      %p84 = por %p82, %p83
      %p85 = scmp.ne.s32.totalorder %s74, %s77
      %p86 = scmp.eq.s32.totalorder %s20, 1
      %p87 = por %p85, %p86
      %p88 = scmp.ne.s32.totalorder %s77, %s78
      %p89 = scmp.eq.s32.totalorder %s20, 0
      %p90 = por %p88, %p89
      %p91 = scmp.ne.s32.totalorder %s77, %s78
      %p92 = scmp.eq.s32.totalorder %s21, 1
      %p93 = por %p91, %p92
      %p95 = scmp.ne.s32.totalorder %s78, %s94
      %p96 = scmp.eq.s32.totalorder %s21, 0
      %p97 = por %p95, %p96
      %s99 = sadd.s32 %s98, 1
      %p102 = scmp.eq.s32.totalorder %s15, 1
      %p103 = scmp.ne.s32.totalorder %s98, %s100
      %p104 = scmp.eq.s32.totalorder %s15, 0
      %p105 = por %p103, %p104
      %p106 = scmp.ne.s32.totalorder %s98, %s100
      %p107 = scmp.eq.s32.totalorder %s20, 1
      %p108 = por %p106, %p107
      %p109 = scmp.ne.s32.totalorder %s100, %s101
      %p110 = scmp.eq.s32.totalorder %s20, 0
      %p111 = por %p109, %p110
      %p112 = scmp.ne.s32.totalorder %s100, %s101
      %p113 = scmp.eq.s32.totalorder %s21, 1
      %p114 = por %p112, %p113
      %p116 = scmp.ne.s32.totalorder %s101, %s115
      %p117 = scmp.eq.s32.totalorder %s21, 0
      %p118 = por %p116, %p117
      %s120 = sadd.s32 %s119, 1
      %p123 = scmp.eq.s32.totalorder %s15, 1
      %p124 = scmp.ne.s32.totalorder %s119, %s121
      %p125 = scmp.eq.s32.totalorder %s15, 0
      %p126 = por %p124, %p125
      %p127 = scmp.ne.s32.totalorder %s119, %s121
      %p128 = scmp.eq.s32.totalorder %s20, 1
      %p129 = por %p127, %p128
      %p130 = scmp.ne.s32.totalorder %s121, %s122
      %p131 = scmp.eq.s32.totalorder %s20, 0
      %p132 = por %p130, %p131
      %p133 = scmp.ne.s32.totalorder %s121, %s122
      %p134 = scmp.eq.s32.totalorder %s21, 1
      %p135 = por %p133, %p134
      %p137 = scmp.ne.s32.totalorder %s122, %s136
      %p138 = scmp.eq.s32.totalorder %s21, 0
      %p139 = por %p137, %p138
      %s141 = sadd.s32 %s140, 1
      %p144 = scmp.eq.s32.totalorder %s15, 1
      %p145 = scmp.ne.s32.totalorder %s140, %s142
      %p146 = scmp.eq.s32.totalorder %s15, 0
      %p147 = por %p145, %p146
      %p148 = scmp.ne.s32.totalorder %s140, %s142
      %p149 = scmp.eq.s32.totalorder %s20, 1
      %p150 = por %p148, %p149
      %p151 = scmp.ne.s32.totalorder %s142, %s143
      %p152 = scmp.eq.s32.totalorder %s20, 0
      %p153 = por %p151, %p152
      %p154 = scmp.ne.s32.totalorder %s142, %s143
      %p155 = scmp.eq.s32.totalorder %s21, 1
      %p156 = por %p154, %p155
      %p158 = scmp.ne.s32.totalorder %s143, %s157
      %p159 = scmp.eq.s32.totalorder %s21, 0
      %p160 = por %p158, %p159
      %s162 = sadd.s32 %s161, 1
      %p165 = scmp.eq.s32.totalorder %s15, 1
      %p166 = scmp.ne.s32.totalorder %s161, %s163
      %p167 = scmp.eq.s32.totalorder %s15, 0
      %p168 = por %p166, %p167
      %p169 = scmp.ne.s32.totalorder %s161, %s163
      %p170 = scmp.eq.s32.totalorder %s20, 1
      %p171 = por %p169, %p170
      %p172 = scmp.ne.s32.totalorder %s163, %s164
      %p173 = scmp.eq.s32.totalorder %s20, 0
      %p174 = por %p172, %p173
      %p175 = scmp.ne.s32.totalorder %s163, %s164
      %p176 = scmp.eq.s32.totalorder %s21, 1
      %p177 = por %p175, %p176
      %p179 = scmp.ne.s32.totalorder %s164, %s178
      %p180 = scmp.eq.s32.totalorder %s21, 0
      %p181 = por %p179, %p180
      %s182 = ssub.s32 %s22, %s41
      %s183 = ssub.s32 %s23, %s37
      %s184 = sor.u32 %s182, %s183
      %p185 = scmp.eq.s32.totalorder %s184, 0
      %s187 = sadd.s32 %s186, 1
      %s188 = scalar_select %p185, %s186, %s187
      %p191 = pneg %p185
      %p192 = scmp.eq.s32.totalorder %s15, 1
      %p193 = por %p191, %p192
      %p194 = scmp.ne.s32.totalorder %s186, %s189
      %p195 = scmp.eq.s32.totalorder %s15, 0
      %p196 = por %p194, %p195
      %p197 = scmp.ne.s32.totalorder %s186, %s189
      %p198 = scmp.eq.s32.totalorder %s20, 1
      %p199 = por %p197, %p198
      %p200 = scmp.ne.s32.totalorder %s189, %s190
      %p201 = scmp.eq.s32.totalorder %s20, 0
      %p202 = por %p200, %p201
      %p203 = scmp.ne.s32.totalorder %s189, %s190
      %p204 = scmp.eq.s32.totalorder %s21, 1
      %p205 = por %p203, %p204
      %p207 = scmp.ne.s32.totalorder %s190, %s206
      %p208 = scmp.eq.s32.totalorder %s21, 0
      %p209 = por %p207, %p208
      %p210 = scmp.le.s32.totalorder 1, %s15
      %p211 = scmp.lt.s32.totalorder %s15, 3
      %p212 = pnand %p210, %p211
      %p213 = pneg %p212
      // Predicated region
      $region9: #{attention_forward.1} parent=5 // pred_check
        _
      $region10: #{attention_forward.1} parent=5 // pred_check_branch
        %215 = sbr.rel (%p212) target = $region12
      $region11: #{attention_forward.1} parent=5 // pred_region
        %s216 = ssub.s32 %s15, 1
        // Predicated region
        $region13: #{attention_forward.1} parent=11 // pred_check
          %p217 = pneg %p111
        $region14: #{attention_forward.1} parent=11 // pred_check_branch
          %219 = sbr.rel (%p217) target = $region16
        $region15: #{attention_forward.1} parent=11 // pred_region
          _
        $region16: #{attention_forward.1} parent=11 // pred_fallthru
          _
        // Predicated region
        $region17: #{attention_forward.1} parent=11 // pred_check
          %p220 = pneg %p132
        $region18: #{attention_forward.1} parent=11 // pred_check_branch
          %222 = sbr.rel (%p220) target = $region20
        $region19: #{attention_forward.1} parent=11 // pred_region
          _
        $region20: #{attention_forward.1} parent=11 // pred_fallthru
          _
        // Predicated region
        $region21: #{attention_forward.1} parent=11 // pred_check
          %p223 = pneg %p153
        $region22: #{attention_forward.1} parent=11 // pred_check_branch
          %225 = sbr.rel (%p223) target = $region24
        $region23: #{attention_forward.1} parent=11 // pred_region
          _
        $region24: #{attention_forward.1} parent=11 // pred_fallthru
          _
        // Predicated region
        $region25: #{attention_forward.1} parent=11 // pred_check
          %p226 = pneg %p174
        $region26: #{attention_forward.1} parent=11 // pred_check_branch
          %228 = sbr.rel (%p226) target = $region28
        $region27: #{attention_forward.1} parent=11 // pred_region
          _
        $region28: #{attention_forward.1} parent=11 // pred_fallthru
          _
      $region12: #{attention_forward.1} parent=5 // pred_fallthru
        _
      %p229 = scmp.lt.s32.totalorder %s15, 2
      // Predicated region
      $region29: #{attention_forward.1} parent=5 // pred_check
        %p230 = pneg %p229
      $region30: #{attention_forward.1} parent=5 // pred_check_branch
        %232 = sbr.rel (%p230) target = $region32
      $region31: #{attention_forward.1} parent=5 // pred_region
        // Predicated region
        $region33: #{attention_forward.1} parent=31 // pred_check
          %p233 = pneg %p56
        $region34: #{attention_forward.1} parent=31 // pred_check_branch
          %235 = sbr.rel (%p233) target = $region36
        $region35: #{attention_forward.1} parent=31 // pred_region
          %p236 = scmp.lt.s32.totalorder %s22, 1
          %s237 = scalar_select %p236, %s22, 1
          %p238 = scmp.lt.s32.totalorder %s23, 0
          %s239 = scalar_select %p238, %s23, 0
          %s240 = sadd.s32 %s239, %s237
          %s241 = smul.addr %s240, 8
          %s242 = scalar_lea.vmem %s0, %s241
        $region36: #{attention_forward.1} parent=31 // pred_fallthru
          _
        // Predicated region
        $region37: #{attention_forward.1} parent=31 // pred_check
          %p243 = pneg %p84
        $region38: #{attention_forward.1} parent=31 // pred_check_branch
          %245 = sbr.rel (%p243) target = $region40
        $region39: #{attention_forward.1} parent=31 // pred_region
          %p246 = scmp.lt.s32.totalorder %s22, 1
          %s247 = scalar_select %p246, %s22, 1
          %p248 = scmp.lt.s32.totalorder %s24, 0
          %s249 = scalar_select %p248, %s24, 0
          %s250 = sadd.s32 %s249, %s247
          %s251 = smul.addr %s250, 8
          %s252 = scalar_lea.vmem %s1, %s251
        $region40: #{attention_forward.1} parent=31 // pred_fallthru
          _
      $region32: #{attention_forward.1} parent=5 // pred_fallthru
        _
      %p253 = scmp.le.s32.totalorder 1, %s15
      %p254 = scmp.lt.s32.totalorder %s15, 3
      %p255 = pnand %p253, %p254
      %p256 = pneg %p255
      // Predicated region
      $region41: #{attention_forward.1} parent=5 // pred_check
        _
      $region42: #{attention_forward.1} parent=5 // pred_check_branch
        %258 = sbr.rel (%p255) target = $region44
      $region43: #{attention_forward.1} parent=5 // pred_region
        %s259 = ssub.s32 %s15, 1
        %p260 = scmp.lt.s32.totalorder %s25, 1
        %s261 = scalar_select %p260, %s25, 1
        %p262 = scmp.lt.s32.totalorder %s26, 0
        %s263 = scalar_select %p262, %s26, 0
        %s264 = sadd.s32 %s263, %s261
        %s265 = smul.addr %s264, 8
        %s266 = scalar_lea.vmem %s0, %s265
        %p267 = pneg %p62
        %p268 = pneg %p59
        %p269 = scmp.lt.s32.totalorder %s25, 1
        %s270 = scalar_select %p269, %s25, 1
        %p271 = scmp.lt.s32.totalorder %s27, 0
        %s272 = scalar_select %p271, %s27, 0
        %s273 = sadd.s32 %s272, %s270
        %s274 = smul.addr %s273, 8
        %s275 = scalar_lea.vmem %s1, %s274
        %p276 = pneg %p90
        %p277 = pneg %p87
        %p278 = pneg %p111
        %p279 = pneg %p108
        %p280 = pneg %p132
        %p281 = pneg %p129
        %p282 = pneg %p153
        %p283 = pneg %p150
        %p284 = pneg %p174
        %p285 = pneg %p171
        %p286 = pneg %p202
        %p287 = pneg %p199
        %s288 = sand.u32 %s189, 1
        %s289 = scalar_lea.sflag [#allocation7], %s288
        %s290 = sand.u32 %s189, 1
        %s291 = smul.addr %s290, 8
        %s292 = scalar_lea.vmem [#allocation6], %s291
        %p293 = scmp.lt.s32.totalorder %s25, 1
        %s294 = scalar_select %p293, %s25, 1
        %p295 = scmp.lt.s32.totalorder %s26, 0
        %s296 = scalar_select %p295, %s26, 0
        %s297 = sadd.s32 %s296, %s294
        %s298 = smul.addr %s297, 8
        %s299 = scalar_lea.vmem %s0, %s298
        %p300 = scmp.lt.s32.totalorder %s25, 1
        %s301 = scalar_select %p300, %s25, 1
        %p302 = scmp.lt.s32.totalorder %s27, 0
        %s303 = scalar_select %p302, %s27, 0
        %s304 = sadd.s32 %s303, %s301
        %s305 = smul.addr %s304, 8
        %s306 = scalar_lea.vmem %s1, %s305
        %p307 = scmp.eq.s32.totalorder %s27, 0
        // Predicated region
        $region45: #{attention_forward.1} parent=43 // pred_check
          %p308 = pneg %p307
        $region46: #{attention_forward.1} parent=43 // pred_check_branch
          %310 = sbr.rel (%p308) target = $region48
        $region47: #{attention_forward.1} parent=43 // pred_region
          %v311 = vld [vmem:[%s299] sm:$0xff]
          %v312 = vld [vmem:[%s2] sm:$0xff]
          %v313 = vld [vmem:[%s2 + $0x8] sm:$0xff]
          %v314 = vld [vmem:[%s2 + $0x10] sm:$0xff]
          %v315 = vld [vmem:[%s2 + $0x18] sm:$0xff]
          %vm316 = vcmask 261120
          %v318 = vsel %vm316, %v311, 0
          %320 = vmatprep.subr.mxu0 0.0
          %321 = vmatpush1.msra.mxu0 %v312
          %322 = vmatprep.subr.mxu0 0.0
          %323 = vmatpush1.msra.mxu0 %v313
          %324 = vmatprep.subr.mxu0 0.0
          %325 = vmatpush1.msra.mxu0 %v314
          %326 = vmatprep.subr.mxu0 0.0
          %327 = vmatpush1.msra.mxu0 %v315
          %328 = vmatprep.subr.mxu0 0.0
          %329 = vmatpush1.msra.mxu0 0.0
          %330 = vmatprep.subr.mxu0 0.0
          %331 = vmatpush1.msra.mxu0 0.0
          %332 = vmatprep.subr.mxu0 0.0
          %333 = vmatpush1.msra.mxu0 0.0
          %334 = vmatprep.subr.mxu0 0.0
          %335 = vmatpush1.msra.mxu0 0.0
          %336 = vmatprep.subr.mxu0 0.0
          %337 = vmatpush1.msra.mxu0 0.0
          %338 = vmatprep.subr.mxu0 0.0
          %339 = vmatpush1.msra.mxu0 0.0
          %340 = vmatprep.subr.mxu0 0.0
          %341 = vmatpush1.msra.mxu0 0.0
          %342 = vmatprep.subr.mxu0 0.0
          %343 = vmatpush1.msra.mxu0 0.0
          %344 = vmatprep.subr.mxu0 0.0
          %345 = vmatpush1.msra.mxu0 0.0
          %346 = vmatprep.subr.mxu0 0.0
          %347 = vmatpush1.msra.mxu0 0.0
          %348 = vmatprep.subr.mxu0 0.0
          %349 = vmatpush1.msra.mxu0 0.0
          %350 = vmatprep.subr.mxu0 0.0
          %351 = vmatpush1.msra.mxu0 0.0
          %352 = vmatprep.subr.mxu0 0.0
          %353 = vmatpush1.msra.mxu0 0.0
          %354 = vmatprep.subr.mxu0 0.0
          %355 = vmatpush1.msra.mxu0 0.0
          %356 = vmatprep.subr.mxu0 0.0
          %357 = vmatpush1.msra.mxu0 0.0
          %358 = vmatprep.subr.mxu0 0.0
          %359 = vmatpush1.msra.mxu0 0.0
          %360 = vmatprep.subr.mxu0 0.0
          %361 = vmatpush1.msra.mxu0 0.0
          %362 = vmatprep.subr.mxu0 0.0
          %363 = vmatpush1.msra.mxu0 0.0
          %364 = vmatprep.subr.mxu0 0.0
          %365 = vmatpush1.msra.mxu0 0.0
          %366 = vmatprep.subr.mxu0 0.0
          %367 = vmatpush1.msra.mxu0 0.0
          %368 = vmatprep.subr.mxu0 0.0
          %369 = vmatpush1.msra.mxu0 0.0
          %370 = vmatprep.subr.mxu0 0.0
          %371 = vmatpush1.msra.mxu0 0.0
          %372 = vmatprep.subr.mxu0 0.0
          %373 = vmatpush1.msra.mxu0 0.0
          %374 = vmatprep.subr.mxu0 0.0
          %375 = vmatpush1.msra.mxu0 0.0
          %376 = vmatprep.subr.mxu0 0.0
          %377 = vmatpush1.msra.mxu0 0.0
          %378 = vmatprep.subr.mxu0 0.0
          %379 = vmatpush1.msra.mxu0 0.0
          %380 = vmatprep.subr.mxu0 0.0
          %381 = vmatpush1.msra.mxu0 0.0
          %382 = vmatprep.subr.mxu0 0.0
          %383 = vmatpush1.msra.mxu0 0.0
          %384 = vmatprep.mubr.f32.mxu0 0.0
          %385 = vmatmul.mubr.f32.gmra.mrb[0].mxu0 %v318
          %v386 = vpop.f32.mrb[0].mxu0
          %v387 = vadd.f32 0.0, %v386
          %v388 = vpop.f32.mrb[0].mxu0
          %389 = vdwg.mxu0
          %v390 = vmul.f32 %v387, 0.25
          %vm391 = vcmask 523264
          %392 = vst.msk [vmem:[#allocation2] sm:$0xff] %vm391, %v390
          %vm393 = vcmask 7168
          %394 = vst.msk [vmem:[#allocation3] sm:$0xff] %vm393, -inf
          %395 = vst.msk [vmem:[#allocation3 + $0x8] sm:$0xff] %vm393, -inf
          %396 = vst.msk [vmem:[#allocation3 + $0x10] sm:$0xff] %vm393, -inf
          %397 = vst.msk [vmem:[#allocation3 + $0x18] sm:$0xff] %vm393, -inf
          %398 = vst.msk [vmem:[#allocation4] sm:$0xff] %vm393, 0.0
          %399 = vst.msk [vmem:[#allocation4 + $0x8] sm:$0xff] %vm393, 0.0
          %400 = vst.msk [vmem:[#allocation4 + $0x10] sm:$0xff] %vm393, 0.0
          %401 = vst.msk [vmem:[#allocation4 + $0x18] sm:$0xff] %vm393, 0.0
          %402 = vst.msk [vmem:[#allocation5] sm:$0xff] %vm391, 0.0
        $region48: #{attention_forward.1} parent=43 // pred_fallthru
          _
        %v403 = vld [vmem:[%s306] sm:$0xff]
        %v404 = vld [vmem:[%s3] sm:$0xff]
        %v405 = vld [vmem:[%s3 + $0x8] sm:$0xff]
        %v406 = vld [vmem:[%s3 + $0x10] sm:$0xff]
        %v407 = vld [vmem:[%s3 + $0x18] sm:$0xff]
        %vm408 = vcmask 261120
        %v410 = vsel %vm408, %v403, 0
        %412 = vmatprep.subr.mxu0 0.0
        %413 = vmatpush1.msra.mxu0 %v404
        %414 = vmatprep.subr.mxu0 0.0
        %415 = vmatpush1.msra.mxu0 %v405
        %416 = vmatprep.subr.mxu0 0.0
        %417 = vmatpush1.msra.mxu0 %v406
        %418 = vmatprep.subr.mxu0 0.0
        %419 = vmatpush1.msra.mxu0 %v407
        %420 = vmatprep.subr.mxu0 0.0
        %421 = vmatpush1.msra.mxu0 0.0
        %422 = vmatprep.subr.mxu0 0.0
        %423 = vmatpush1.msra.mxu0 0.0
        %424 = vmatprep.subr.mxu0 0.0
        %425 = vmatpush1.msra.mxu0 0.0
        %426 = vmatprep.subr.mxu0 0.0
        %427 = vmatpush1.msra.mxu0 0.0
        %428 = vmatprep.subr.mxu0 0.0
        %429 = vmatpush1.msra.mxu0 0.0
        %430 = vmatprep.subr.mxu0 0.0
        %431 = vmatpush1.msra.mxu0 0.0
        %432 = vmatprep.subr.mxu0 0.0
        %433 = vmatpush1.msra.mxu0 0.0
        %434 = vmatprep.subr.mxu0 0.0
        %435 = vmatpush1.msra.mxu0 0.0
        %436 = vmatprep.subr.mxu0 0.0
        %437 = vmatpush1.msra.mxu0 0.0
        %438 = vmatprep.subr.mxu0 0.0
        %439 = vmatpush1.msra.mxu0 0.0
        %440 = vmatprep.subr.mxu0 0.0
        %441 = vmatpush1.msra.mxu0 0.0
        %442 = vmatprep.subr.mxu0 0.0
        %443 = vmatpush1.msra.mxu0 0.0
        %444 = vmatprep.subr.mxu0 0.0
        %445 = vmatpush1.msra.mxu0 0.0
        %446 = vmatprep.subr.mxu0 0.0
        %447 = vmatpush1.msra.mxu0 0.0
        %448 = vmatprep.subr.mxu0 0.0
        %449 = vmatpush1.msra.mxu0 0.0
        %450 = vmatprep.subr.mxu0 0.0
        %451 = vmatpush1.msra.mxu0 0.0
        %452 = vmatprep.subr.mxu0 0.0
        %453 = vmatpush1.msra.mxu0 0.0
        %454 = vmatprep.subr.mxu0 0.0
        %455 = vmatpush1.msra.mxu0 0.0
        %456 = vmatprep.subr.mxu0 0.0
        %457 = vmatpush1.msra.mxu0 0.0
        %458 = vmatprep.subr.mxu0 0.0
        %459 = vmatpush1.msra.mxu0 0.0
        %460 = vmatprep.subr.mxu0 0.0
        %461 = vmatpush1.msra.mxu0 0.0
        %462 = vmatprep.subr.mxu0 0.0
        %463 = vmatpush1.msra.mxu0 0.0
        %464 = vmatprep.subr.mxu0 0.0
        %465 = vmatpush1.msra.mxu0 0.0
        %466 = vmatprep.subr.mxu0 0.0
        %467 = vmatpush1.msra.mxu0 0.0
        %468 = vmatprep.subr.mxu0 0.0
        %469 = vmatpush1.msra.mxu0 0.0
        %470 = vmatprep.subr.mxu0 0.0
        %471 = vmatpush1.msra.mxu0 0.0
        %472 = vmatprep.subr.mxu0 0.0
        %473 = vmatpush1.msra.mxu0 0.0
        %474 = vmatprep.subr.mxu0 0.0
        %475 = vmatpush1.msra.mxu0 0.0
        %476 = vmatprep.mubr.f32.mxu0 0.0
        %477 = vmatmul.mubr.f32.gmra.mrb[0].mxu0 %v410
        %v478 = vpop.f32.mrb[0].mxu0
        %v479 = vadd.f32 0.0, %v478
        %v480 = vpop.f32.mrb[0].mxu0
        %481 = vdwg.mxu0
        %v482 = vld [vmem:[%s4] sm:$0xff]
        %v483 = vld [vmem:[%s4 + $0x8] sm:$0xff]
        %v484 = vld [vmem:[%s4 + $0x10] sm:$0xff]
        %v485 = vld [vmem:[%s4 + $0x18] sm:$0xff]
        %486 = vmatprep.subr.mxu0 0.0
        %487 = vmatpush1.msra.mxu0 %v482
        %488 = vmatprep.subr.mxu0 0.0
        %489 = vmatpush1.msra.mxu0 %v483
        %490 = vmatprep.subr.mxu0 0.0
        %491 = vmatpush1.msra.mxu0 %v484
        %492 = vmatprep.subr.mxu0 0.0
        %493 = vmatpush1.msra.mxu0 %v485
        %494 = vmatprep.subr.mxu0 0.0
        %495 = vmatpush1.msra.mxu0 0.0
        %496 = vmatprep.subr.mxu0 0.0
        %497 = vmatpush1.msra.mxu0 0.0
        %498 = vmatprep.subr.mxu0 0.0
        %499 = vmatpush1.msra.mxu0 0.0
        %500 = vmatprep.subr.mxu0 0.0
        %501 = vmatpush1.msra.mxu0 0.0
        %502 = vmatprep.subr.mxu0 0.0
        %503 = vmatpush1.msra.mxu0 0.0
        %504 = vmatprep.subr.mxu0 0.0
        %505 = vmatpush1.msra.mxu0 0.0
        %506 = vmatprep.subr.mxu0 0.0
        %507 = vmatpush1.msra.mxu0 0.0
        %508 = vmatprep.subr.mxu0 0.0
        %509 = vmatpush1.msra.mxu0 0.0
        %510 = vmatprep.subr.mxu0 0.0
        %511 = vmatpush1.msra.mxu0 0.0
        %512 = vmatprep.subr.mxu0 0.0
        %513 = vmatpush1.msra.mxu0 0.0
        %514 = vmatprep.subr.mxu0 0.0
        %515 = vmatpush1.msra.mxu0 0.0
        %516 = vmatprep.subr.mxu0 0.0
        %517 = vmatpush1.msra.mxu0 0.0
        %518 = vmatprep.subr.mxu0 0.0
        %519 = vmatpush1.msra.mxu0 0.0
        %520 = vmatprep.subr.mxu0 0.0
        %521 = vmatpush1.msra.mxu0 0.0
        %522 = vmatprep.subr.mxu0 0.0
        %523 = vmatpush1.msra.mxu0 0.0
        %524 = vmatprep.subr.mxu0 0.0
        %525 = vmatpush1.msra.mxu0 0.0
        %526 = vmatprep.subr.mxu0 0.0
        %527 = vmatpush1.msra.mxu0 0.0
        %528 = vmatprep.subr.mxu0 0.0
        %529 = vmatpush1.msra.mxu0 0.0
        %530 = vmatprep.subr.mxu0 0.0
        %531 = vmatpush1.msra.mxu0 0.0
        %532 = vmatprep.subr.mxu0 0.0
        %533 = vmatpush1.msra.mxu0 0.0
        %534 = vmatprep.subr.mxu0 0.0
        %535 = vmatpush1.msra.mxu0 0.0
        %536 = vmatprep.subr.mxu0 0.0
        %537 = vmatpush1.msra.mxu0 0.0
        %538 = vmatprep.subr.mxu0 0.0
        %539 = vmatpush1.msra.mxu0 0.0
        %540 = vmatprep.subr.mxu0 0.0
        %541 = vmatpush1.msra.mxu0 0.0
        %542 = vmatprep.subr.mxu0 0.0
        %543 = vmatpush1.msra.mxu0 0.0
        %544 = vmatprep.subr.mxu0 0.0
        %545 = vmatpush1.msra.mxu0 0.0
        %546 = vmatprep.subr.mxu0 0.0
        %547 = vmatpush1.msra.mxu0 0.0
        %548 = vmatprep.subr.mxu0 0.0
        %549 = vmatpush1.msra.mxu0 0.0
        %550 = vmatprep.mubr.f32.mxu0 0.0
        %551 = vmatmul.mubr.f32.gmra.mrb[0].mxu0 %v410
        %v552 = vpop.f32.mrb[0].mxu0
        %v553 = vadd.f32 0.0, %v552
        %v554 = vpop.f32.mrb[0].mxu0
        %555 = vdwg.mxu0
        %v556 = vld [vmem:[#allocation2] sm:$0xff]
        %vm557 = vcmask 130048
        %v559 = vsel %vm557, %v556, 0
        %v562 = vsel %vm557, %v479, 0
        %564 = vmatprep.subr.mxu0 0.0
        %565 = vmatpush1.xpose.msra.mxu0 %v562
        %566 = vmatprep.subr.mxu0 0.0
        %567 = vmatpush1.xpose.msra.mxu0 0.0
        %568 = vmatprep.subr.mxu0 0.0
        %569 = vmatpush1.xpose.msra.mxu0 0.0
        %570 = vmatprep.subr.mxu0 0.0
        %571 = vmatpush1.xpose.msra.mxu0 0.0
        %572 = vmatprep.subr.mxu0 0.0
        %573 = vmatpush1.xpose.msra.mxu0 0.0
        %574 = vmatprep.subr.mxu0 0.0
        %575 = vmatpush1.xpose.msra.mxu0 0.0
        %576 = vmatprep.subr.mxu0 0.0
        %577 = vmatpush1.xpose.msra.mxu0 0.0
        %578 = vmatprep.subr.mxu0 0.0
        %579 = vmatpush1.xpose.msra.mxu0 0.0
        %580 = vmatprep.subr.mxu0 0.0
        %581 = vmatpush1.xpose.msra.mxu0 0.0
        %582 = vmatprep.subr.mxu0 0.0
        %583 = vmatpush1.xpose.msra.mxu0 0.0
        %584 = vmatprep.subr.mxu0 0.0
        %585 = vmatpush1.xpose.msra.mxu0 0.0
        %586 = vmatprep.subr.mxu0 0.0
        %587 = vmatpush1.xpose.msra.mxu0 0.0
        %588 = vmatprep.subr.mxu0 0.0
        %589 = vmatpush1.xpose.msra.mxu0 0.0
        %590 = vmatprep.subr.mxu0 0.0
        %591 = vmatpush1.xpose.msra.mxu0 0.0
        %592 = vmatprep.subr.mxu0 0.0
        %593 = vmatpush1.xpose.msra.mxu0 0.0
        %594 = vmatprep.subr.mxu0 0.0
        %595 = vmatpush1.xpose.msra.mxu0 0.0
        %596 = vmatprep.subr.mxu0 0.0
        %597 = vmatpush1.xpose.msra.mxu0 0.0
        %598 = vmatprep.subr.mxu0 0.0
        %599 = vmatpush1.xpose.msra.mxu0 0.0
        %600 = vmatprep.subr.mxu0 0.0
        %601 = vmatpush1.xpose.msra.mxu0 0.0
        %602 = vmatprep.subr.mxu0 0.0
        %603 = vmatpush1.xpose.msra.mxu0 0.0
        %604 = vmatprep.subr.mxu0 0.0
        %605 = vmatpush1.xpose.msra.mxu0 0.0
        %606 = vmatprep.subr.mxu0 0.0
        %607 = vmatpush1.xpose.msra.mxu0 0.0
        %608 = vmatprep.subr.mxu0 0.0
        %609 = vmatpush1.xpose.msra.mxu0 0.0
        %610 = vmatprep.subr.mxu0 0.0
        %611 = vmatpush1.xpose.msra.mxu0 0.0
        %612 = vmatprep.subr.mxu0 0.0
        %613 = vmatpush1.xpose.msra.mxu0 0.0
        %614 = vmatprep.subr.mxu0 0.0
        %615 = vmatpush1.xpose.msra.mxu0 0.0
        %616 = vmatprep.subr.mxu0 0.0
        %617 = vmatpush1.xpose.msra.mxu0 0.0
        %618 = vmatprep.subr.mxu0 0.0
        %619 = vmatpush1.xpose.msra.mxu0 0.0
        %620 = vmatprep.subr.mxu0 0.0
        %621 = vmatpush1.xpose.msra.mxu0 0.0
        %622 = vmatprep.subr.mxu0 0.0
        %623 = vmatpush1.xpose.msra.mxu0 0.0
        %624 = vmatprep.subr.mxu0 0.0
        %625 = vmatpush1.xpose.msra.mxu0 0.0
        %626 = vmatprep.subr.mxu0 0.0
        %627 = vmatpush1.xpose.msra.mxu0 0.0
        %628 = vmatprep.mubr.f32.mxu0 0.0
        %629 = vmatmul.mubr.f32.gmra.mrb[0].mxu0 %v559
        %v630 = vpop.f32.mrb[0].mxu0
        %v631 = vadd.f32 0.0, %v630
        %v632 = vpop.f32.mrb[0].mxu0
        %633 = vdwg.mxu0
        %v634 = vld [vmem:[#allocation3] sm:$0xff]
        %vm635 = vcmask 64512
        %v636 = vsel %vm635, %v631, -inf
        %637 = vmax.xlane.f32.xlu0 %v636
        %v638 = vpop.xlane.xlu0 %637
        %v639 = vmax.f32 %v634, %v638
        %v640 = vsub.f32 %v634, %v639
        %v641 = vmul.f32 %v640, 1.442695
        %v642 = vpow.pop %v641
        %644 = vset.pattern.permute.xlu0 0
        %645 = vperm.xlu0 %644, %v639
        %v646 = vpop.permute.xlu0 %645
        %v648 = vsub.f32 %v631, %v646
        %v649 = vmul.f32 %v648, 1.442695
        %v650 = vpow.pop %v649
        %v651 = vld [vmem:[#allocation4] sm:$0xff]
        %v652 = vmul.f32 %v642, %v651
        %v653 = vsel %vm635, %v650, 0.0
        %654 = vadd.xlane.f32.xlu0 %v653
        %v655 = vpop.xlane.xlu0 %654
        %v656 = vadd.f32 %v652, %v655
        %vm657 = vcmask 7168
        %658 = vst.msk [vmem:[#allocation4] sm:$0xff] %vm657, %v656
        %v659 = vld [vmem:[#allocation5] sm:$0xff]
        %661 = vset.pattern.permute.xlu0 0
        %662 = vperm.xlu0 %661, %v642
        %v663 = vpop.permute.xlu0 %662
        %v665 = vmul.f32 %v663, %v659
        %v667 = vsel %vm635, %v650, 0
        %669 = vmatprep.subr.mxu0 0.0
        %670 = vmatpush1.msra.mxu0 %v553
        %671 = vmatprep.subr.mxu0 0.0
        %672 = vmatpush1.msra.mxu0 0.0
        %673 = vmatprep.subr.mxu0 0.0
        %674 = vmatpush1.msra.mxu0 0.0
        %675 = vmatprep.subr.mxu0 0.0
        %676 = vmatpush1.msra.mxu0 0.0
        %677 = vmatprep.subr.mxu0 0.0
        %678 = vmatpush1.msra.mxu0 0.0
        %679 = vmatprep.subr.mxu0 0.0
        %680 = vmatpush1.msra.mxu0 0.0
        %681 = vmatprep.subr.mxu0 0.0
        %682 = vmatpush1.msra.mxu0 0.0
        %683 = vmatprep.subr.mxu0 0.0
        %684 = vmatpush1.msra.mxu0 0.0
        %685 = vmatprep.subr.mxu0 0.0
        %686 = vmatpush1.msra.mxu0 0.0
        %687 = vmatprep.subr.mxu0 0.0
        %688 = vmatpush1.msra.mxu0 0.0
        %689 = vmatprep.subr.mxu0 0.0
        %690 = vmatpush1.msra.mxu0 0.0
        %691 = vmatprep.subr.mxu0 0.0
        %692 = vmatpush1.msra.mxu0 0.0
        %693 = vmatprep.subr.mxu0 0.0
        %694 = vmatpush1.msra.mxu0 0.0
        %695 = vmatprep.subr.mxu0 0.0
        %696 = vmatpush1.msra.mxu0 0.0
        %697 = vmatprep.subr.mxu0 0.0
        %698 = vmatpush1.msra.mxu0 0.0
        %699 = vmatprep.subr.mxu0 0.0
        %700 = vmatpush1.msra.mxu0 0.0
        %701 = vmatprep.subr.mxu0 0.0
        %702 = vmatpush1.msra.mxu0 0.0
        %703 = vmatprep.subr.mxu0 0.0
        %704 = vmatpush1.msra.mxu0 0.0
        %705 = vmatprep.subr.mxu0 0.0
        %706 = vmatpush1.msra.mxu0 0.0
        %707 = vmatprep.subr.mxu0 0.0
        %708 = vmatpush1.msra.mxu0 0.0
        %709 = vmatprep.subr.mxu0 0.0
        %710 = vmatpush1.msra.mxu0 0.0
        %711 = vmatprep.subr.mxu0 0.0
        %712 = vmatpush1.msra.mxu0 0.0
        %713 = vmatprep.subr.mxu0 0.0
        %714 = vmatpush1.msra.mxu0 0.0
        %715 = vmatprep.subr.mxu0 0.0
        %716 = vmatpush1.msra.mxu0 0.0
        %717 = vmatprep.subr.mxu0 0.0
        %718 = vmatpush1.msra.mxu0 0.0
        %719 = vmatprep.subr.mxu0 0.0
        %720 = vmatpush1.msra.mxu0 0.0
        %721 = vmatprep.subr.mxu0 0.0
        %722 = vmatpush1.msra.mxu0 0.0
        %723 = vmatprep.subr.mxu0 0.0
        %724 = vmatpush1.msra.mxu0 0.0
        %725 = vmatprep.subr.mxu0 0.0
        %726 = vmatpush1.msra.mxu0 0.0
        %727 = vmatprep.subr.mxu0 0.0
        %728 = vmatpush1.msra.mxu0 0.0
        %729 = vmatprep.subr.mxu0 0.0
        %730 = vmatpush1.msra.mxu0 0.0
        %731 = vmatprep.subr.mxu0 0.0
        %732 = vmatpush1.msra.mxu0 0.0
        %733 = vmatprep.mubr.f32.mxu0 0.0
        %734 = vmatmul.mubr.f32.gmra.mrb[0].mxu0 %v667
        %v735 = vpop.f32.mrb[0].mxu0
        %v736 = vadd.f32 0.0, %v735
        %v737 = vpop.f32.mrb[0].mxu0
        %738 = vdwg.mxu0
        %v739 = vadd.f32 %v665, %v736
        %740 = vst.msk [vmem:[#allocation5] sm:$0xff] %vm557, %v739
        %741 = vst.msk [vmem:[#allocation3] sm:$0xff] %vm657, %v639
        %v742 = vld [vmem:[#allocation2] sm:$0xff]
        %744 = vrot.lane.b32.xlu0 %v742, 112
        %v745 = vpop.permute.xlu0 %744
        %746 = vrot.lane.b32.xlu0 %v479, 112
        %v747 = vpop.permute.xlu0 %746
        %v748 = vsel %vm557, %v745, 0
        %v750 = vsel %vm557, %v747, 0
        %752 = vmatprep.subr.mxu0 0.0
        %753 = vmatpush1.xpose.msra.mxu0 %v750
        %754 = vmatprep.subr.mxu0 0.0
        %755 = vmatpush1.xpose.msra.mxu0 0.0
        %756 = vmatprep.subr.mxu0 0.0
        %757 = vmatpush1.xpose.msra.mxu0 0.0
        %758 = vmatprep.subr.mxu0 0.0
        %759 = vmatpush1.xpose.msra.mxu0 0.0
        %760 = vmatprep.subr.mxu0 0.0
        %761 = vmatpush1.xpose.msra.mxu0 0.0
        %762 = vmatprep.subr.mxu0 0.0
        %763 = vmatpush1.xpose.msra.mxu0 0.0
        %764 = vmatprep.subr.mxu0 0.0
        %765 = vmatpush1.xpose.msra.mxu0 0.0
        %766 = vmatprep.subr.mxu0 0.0
        %767 = vmatpush1.xpose.msra.mxu0 0.0
        %768 = vmatprep.subr.mxu0 0.0
        %769 = vmatpush1.xpose.msra.mxu0 0.0
        %770 = vmatprep.subr.mxu0 0.0
        %771 = vmatpush1.xpose.msra.mxu0 0.0
        %772 = vmatprep.subr.mxu0 0.0
        %773 = vmatpush1.xpose.msra.mxu0 0.0
        %774 = vmatprep.subr.mxu0 0.0
        %775 = vmatpush1.xpose.msra.mxu0 0.0
        %776 = vmatprep.subr.mxu0 0.0
        %777 = vmatpush1.xpose.msra.mxu0 0.0
        %778 = vmatprep.subr.mxu0 0.0
        %779 = vmatpush1.xpose.msra.mxu0 0.0
        %780 = vmatprep.subr.mxu0 0.0
        %781 = vmatpush1.xpose.msra.mxu0 0.0
        %782 = vmatprep.subr.mxu0 0.0
        %783 = vmatpush1.xpose.msra.mxu0 0.0
        %784 = vmatprep.subr.mxu0 0.0
        %785 = vmatpush1.xpose.msra.mxu0 0.0
        %786 = vmatprep.subr.mxu0 0.0
        %787 = vmatpush1.xpose.msra.mxu0 0.0
        %788 = vmatprep.subr.mxu0 0.0
        %789 = vmatpush1.xpose.msra.mxu0 0.0
        %790 = vmatprep.subr.mxu0 0.0
        %791 = vmatpush1.xpose.msra.mxu0 0.0
        %792 = vmatprep.subr.mxu0 0.0
        %793 = vmatpush1.xpose.msra.mxu0 0.0
        %794 = vmatprep.subr.mxu0 0.0
        %795 = vmatpush1.xpose.msra.mxu0 0.0
        %796 = vmatprep.subr.mxu0 0.0
        %797 = vmatpush1.xpose.msra.mxu0 0.0
        %798 = vmatprep.subr.mxu0 0.0
        %799 = vmatpush1.xpose.msra.mxu0 0.0
        %800 = vmatprep.subr.mxu0 0.0
        %801 = vmatpush1.xpose.msra.mxu0 0.0
        %802 = vmatprep.subr.mxu0 0.0
        %803 = vmatpush1.xpose.msra.mxu0 0.0
        %804 = vmatprep.subr.mxu0 0.0
        %805 = vmatpush1.xpose.msra.mxu0 0.0
        %806 = vmatprep.subr.mxu0 0.0
        %807 = vmatpush1.xpose.msra.mxu0 0.0
        %808 = vmatprep.subr.mxu0 0.0
        %809 = vmatpush1.xpose.msra.mxu0 0.0
        %810 = vmatprep.subr.mxu0 0.0
        %811 = vmatpush1.xpose.msra.mxu0 0.0
        %812 = vmatprep.subr.mxu0 0.0
        %813 = vmatpush1.xpose.msra.mxu0 0.0
        %814 = vmatprep.subr.mxu0 0.0
        %815 = vmatpush1.xpose.msra.mxu0 0.0
        %816 = vmatprep.mubr.f32.mxu0 0.0
        %817 = vmatmul.mubr.f32.gmra.mrb[0].mxu0 %v748
        %v818 = vpop.f32.mrb[0].mxu0
        %v819 = vadd.f32 0.0, %v818
        %v820 = vpop.f32.mrb[0].mxu0
        %821 = vdwg.mxu0
        %s822 = scalar_lea.vmem [#allocation3], 8
        %v823 = vld [vmem:[%s822] sm:$0xff]
        %v824 = vsel %vm635, %v819, -inf
        %825 = vmax.xlane.f32.xlu0 %v824
        %v826 = vpop.xlane.xlu0 %825
        %v827 = vmax.f32 %v823, %v826
        %v828 = vsub.f32 %v823, %v827
        %v829 = vmul.f32 %v828, 1.442695
        %v830 = vpow.pop %v829
        %832 = vset.pattern.permute.xlu0 0
        %833 = vperm.xlu0 %832, %v827
        %v834 = vpop.permute.xlu0 %833
        %v836 = vsub.f32 %v819, %v834
        %v837 = vmul.f32 %v836, 1.442695
        %v838 = vpow.pop %v837
        %s839 = scalar_lea.vmem [#allocation4], 8
        %v840 = vld [vmem:[%s839] sm:$0xff]
        %v841 = vmul.f32 %v830, %v840
        %v842 = vsel %vm635, %v838, 0.0
        %843 = vadd.xlane.f32.xlu0 %v842
        %v844 = vpop.xlane.xlu0 %843
        %v845 = vadd.f32 %v841, %v844
        %846 = vst.msk [vmem:[%s839] sm:$0xff] %vm657, %v845
        %v847 = vld [vmem:[#allocation5] sm:$0xff]
        %849 = vset.pattern.permute.xlu0 0
        %850 = vperm.xlu0 %849, %v830
        %v851 = vpop.permute.xlu0 %850
        %v853 = vmul.f32 %v851, %v847
        %855 = vrot.lane.b32.xlu0 %v553, 112
        %v856 = vpop.permute.xlu0 %855
        %v859 = vsel %vm635, %v838, 0
        %861 = vmatprep.subr.mxu0 0.0
        %862 = vmatpush1.msra.mxu0 %v856
        %863 = vmatprep.subr.mxu0 0.0
        %864 = vmatpush1.msra.mxu0 0.0
        %865 = vmatprep.subr.mxu0 0.0
        %866 = vmatpush1.msra.mxu0 0.0
        %867 = vmatprep.subr.mxu0 0.0
        %868 = vmatpush1.msra.mxu0 0.0
        %869 = vmatprep.subr.mxu0 0.0
        %870 = vmatpush1.msra.mxu0 0.0
        %871 = vmatprep.subr.mxu0 0.0
        %872 = vmatpush1.msra.mxu0 0.0
        %873 = vmatprep.subr.mxu0 0.0
        %874 = vmatpush1.msra.mxu0 0.0
        %875 = vmatprep.subr.mxu0 0.0
        %876 = vmatpush1.msra.mxu0 0.0
        %877 = vmatprep.subr.mxu0 0.0
        %878 = vmatpush1.msra.mxu0 0.0
        %879 = vmatprep.subr.mxu0 0.0
        %880 = vmatpush1.msra.mxu0 0.0
        %881 = vmatprep.subr.mxu0 0.0
        %882 = vmatpush1.msra.mxu0 0.0
        %883 = vmatprep.subr.mxu0 0.0
        %884 = vmatpush1.msra.mxu0 0.0
        %885 = vmatprep.subr.mxu0 0.0
        %886 = vmatpush1.msra.mxu0 0.0
        %887 = vmatprep.subr.mxu0 0.0
        %888 = vmatpush1.msra.mxu0 0.0
        %889 = vmatprep.subr.mxu0 0.0
        %890 = vmatpush1.msra.mxu0 0.0
        %891 = vmatprep.subr.mxu0 0.0
        %892 = vmatpush1.msra.mxu0 0.0
        %893 = vmatprep.subr.mxu0 0.0
        %894 = vmatpush1.msra.mxu0 0.0
        %895 = vmatprep.subr.mxu0 0.0
        %896 = vmatpush1.msra.mxu0 0.0
        %897 = vmatprep.subr.mxu0 0.0
        %898 = vmatpush1.msra.mxu0 0.0
        %899 = vmatprep.subr.mxu0 0.0
        %900 = vmatpush1.msra.mxu0 0.0
        %901 = vmatprep.subr.mxu0 0.0
        %902 = vmatpush1.msra.mxu0 0.0
        %903 = vmatprep.subr.mxu0 0.0
        %904 = vmatpush1.msra.mxu0 0.0
        %905 = vmatprep.subr.mxu0 0.0
        %906 = vmatpush1.msra.mxu0 0.0
        %907 = vmatprep.subr.mxu0 0.0
        %908 = vmatpush1.msra.mxu0 0.0
        %909 = vmatprep.subr.mxu0 0.0
        %910 = vmatpush1.msra.mxu0 0.0
        %911 = vmatprep.subr.mxu0 0.0
        %912 = vmatpush1.msra.mxu0 0.0
        %913 = vmatprep.subr.mxu0 0.0
        %914 = vmatpush1.msra.mxu0 0.0
        %915 = vmatprep.subr.mxu0 0.0
        %916 = vmatpush1.msra.mxu0 0.0
        %917 = vmatprep.subr.mxu0 0.0
        %918 = vmatpush1.msra.mxu0 0.0
        %919 = vmatprep.subr.mxu0 0.0
        %920 = vmatpush1.msra.mxu0 0.0
        %921 = vmatprep.subr.mxu0 0.0
        %922 = vmatpush1.msra.mxu0 0.0
        %923 = vmatprep.subr.mxu0 0.0
        %924 = vmatpush1.msra.mxu0 0.0
        %925 = vmatprep.mubr.f32.mxu0 0.0
        %926 = vmatmul.mubr.f32.gmra.mrb[0].mxu0 %v859
        %v927 = vpop.f32.mrb[0].mxu0
        %v928 = vadd.f32 0.0, %v927
        %v929 = vpop.f32.mrb[0].mxu0
        %930 = vdwg.mxu0
        %932 = vrot.lane.b32.xlu0 %v928, 16
        %v933 = vpop.permute.xlu0 %932
        %v935 = vadd.f32 %v853, %v933
        %vm936 = vcmask 261248
        %937 = vst.msk [vmem:[#allocation5] sm:$0xff] %vm936, %v935
        %938 = vst.msk [vmem:[%s822] sm:$0xff] %vm657, %v827
        %v939 = vld [vmem:[#allocation2] sm:$0xff]
        %941 = vrot.lane.b32.xlu0 %v939, 96
        %v942 = vpop.permute.xlu0 %941
        %943 = vrot.lane.b32.xlu0 %v479, 96
        %v944 = vpop.permute.xlu0 %943
        %v945 = vsel %vm557, %v942, 0
        %v947 = vsel %vm557, %v944, 0
        %949 = vmatprep.subr.mxu0 0.0
        %950 = vmatpush1.xpose.msra.mxu0 %v947
        %951 = vmatprep.subr.mxu0 0.0
        %952 = vmatpush1.xpose.msra.mxu0 0.0
        %953 = vmatprep.subr.mxu0 0.0
        %954 = vmatpush1.xpose.msra.mxu0 0.0
        %955 = vmatprep.subr.mxu0 0.0
        %956 = vmatpush1.xpose.msra.mxu0 0.0
        %957 = vmatprep.subr.mxu0 0.0
        %958 = vmatpush1.xpose.msra.mxu0 0.0
        %959 = vmatprep.subr.mxu0 0.0
        %960 = vmatpush1.xpose.msra.mxu0 0.0
        %961 = vmatprep.subr.mxu0 0.0
        %962 = vmatpush1.xpose.msra.mxu0 0.0
        %963 = vmatprep.subr.mxu0 0.0
        %964 = vmatpush1.xpose.msra.mxu0 0.0
        %965 = vmatprep.subr.mxu0 0.0
        %966 = vmatpush1.xpose.msra.mxu0 0.0
        %967 = vmatprep.subr.mxu0 0.0
        %968 = vmatpush1.xpose.msra.mxu0 0.0
        %969 = vmatprep.subr.mxu0 0.0
        %970 = vmatpush1.xpose.msra.mxu0 0.0
        %971 = vmatprep.subr.mxu0 0.0
        %972 = vmatpush1.xpose.msra.mxu0 0.0
        %973 = vmatprep.subr.mxu0 0.0
        %974 = vmatpush1.xpose.msra.mxu0 0.0
        %975 = vmatprep.subr.mxu0 0.0
        %976 = vmatpush1.xpose.msra.mxu0 0.0
        %977 = vmatprep.subr.mxu0 0.0
        %978 = vmatpush1.xpose.msra.mxu0 0.0
        %979 = vmatprep.subr.mxu0 0.0
        %980 = vmatpush1.xpose.msra.mxu0 0.0
        %981 = vmatprep.subr.mxu0 0.0
        %982 = vmatpush1.xpose.msra.mxu0 0.0
        %983 = vmatprep.subr.mxu0 0.0
        %984 = vmatpush1.xpose.msra.mxu0 0.0
        %985 = vmatprep.subr.mxu0 0.0
        %986 = vmatpush1.xpose.msra.mxu0 0.0
        %987 = vmatprep.subr.mxu0 0.0
        %988 = vmatpush1.xpose.msra.mxu0 0.0
        %989 = vmatprep.subr.mxu0 0.0
        %990 = vmatpush1.xpose.msra.mxu0 0.0
        %991 = vmatprep.subr.mxu0 0.0
        %992 = vmatpush1.xpose.msra.mxu0 0.0
        %993 = vmatprep.subr.mxu0 0.0
        %994 = vmatpush1.xpose.msra.mxu0 0.0
        %995 = vmatprep.subr.mxu0 0.0
        %996 = vmatpush1.xpose.msra.mxu0 0.0
        %997 = vmatprep.subr.mxu0 0.0
        %998 = vmatpush1.xpose.msra.mxu0 0.0
        %999 = vmatprep.subr.mxu0 0.0
        %1000 = vmatpush1.xpose.msra.mxu0 0.0
        %1001 = vmatprep.subr.mxu0 0.0
        %1002 = vmatpush1.xpose.msra.mxu0 0.0
        %1003 = vmatprep.subr.mxu0 0.0
        %1004 = vmatpush1.xpose.msra.mxu0 0.0
        %1005 = vmatprep.subr.mxu0 0.0
        %1006 = vmatpush1.xpose.msra.mxu0 0.0
        %1007 = vmatprep.subr.mxu0 0.0
        %1008 = vmatpush1.xpose.msra.mxu0 0.0
        %1009 = vmatprep.subr.mxu0 0.0
        %1010 = vmatpush1.xpose.msra.mxu0 0.0
        %1011 = vmatprep.subr.mxu0 0.0
        %1012 = vmatpush1.xpose.msra.mxu0 0.0
        %1013 = vmatprep.mubr.f32.mxu0 0.0
        %1014 = vmatmul.mubr.f32.gmra.mrb[0].mxu0 %v945
        %v1015 = vpop.f32.mrb[0].mxu0
        %v1016 = vadd.f32 0.0, %v1015
        %v1017 = vpop.f32.mrb[0].mxu0
        %1018 = vdwg.mxu0
        %s1019 = scalar_lea.vmem [#allocation3], 16
        %v1020 = vld [vmem:[%s1019] sm:$0xff]
        %v1021 = vsel %vm635, %v1016, -inf
        %1022 = vmax.xlane.f32.xlu0 %v1021
        %v1023 = vpop.xlane.xlu0 %1022
        %v1024 = vmax.f32 %v1020, %v1023
        %v1025 = vsub.f32 %v1020, %v1024
        %v1026 = vmul.f32 %v1025, 1.442695
        %v1027 = vpow.pop %v1026
        %1029 = vset.pattern.permute.xlu0 0
        %1030 = vperm.xlu0 %1029, %v1024
        %v1031 = vpop.permute.xlu0 %1030
        %v1033 = vsub.f32 %v1016, %v1031
        %v1034 = vmul.f32 %v1033, 1.442695
        %v1035 = vpow.pop %v1034
        %s1036 = scalar_lea.vmem [#allocation4], 16
        %v1037 = vld [vmem:[%s1036] sm:$0xff]
        %v1038 = vmul.f32 %v1027, %v1037
        %v1039 = vsel %vm635, %v1035, 0.0
        %1040 = vadd.xlane.f32.xlu0 %v1039
        %v1041 = vpop.xlane.xlu0 %1040
        %v1042 = vadd.f32 %v1038, %v1041
        %1043 = vst.msk [vmem:[%s1036] sm:$0xff] %vm657, %v1042
        %v1044 = vld [vmem:[#allocation5] sm:$0xff]
        %1046 = vset.pattern.permute.xlu0 0
        %1047 = vperm.xlu0 %1046, %v1027
        %v1048 = vpop.permute.xlu0 %1047
        %v1050 = vmul.f32 %v1048, %v1044
        %1051 = vrot.lane.b32.xlu0 %v553, 96
        %v1052 = vpop.permute.xlu0 %1051
        %v1055 = vsel %vm635, %v1035, 0
        %1057 = vmatprep.subr.mxu0 0.0
        %1058 = vmatpush1.msra.mxu0 %v1052
        %1059 = vmatprep.subr.mxu0 0.0
        %1060 = vmatpush1.msra.mxu0 0.0
        %1061 = vmatprep.subr.mxu0 0.0
        %1062 = vmatpush1.msra.mxu0 0.0
        %1063 = vmatprep.subr.mxu0 0.0
        %1064 = vmatpush1.msra.mxu0 0.0
        %1065 = vmatprep.subr.mxu0 0.0
        %1066 = vmatpush1.msra.mxu0 0.0
        %1067 = vmatprep.subr.mxu0 0.0
        %1068 = vmatpush1.msra.mxu0 0.0
        %1069 = vmatprep.subr.mxu0 0.0
        %1070 = vmatpush1.msra.mxu0 0.0
        %1071 = vmatprep.subr.mxu0 0.0
        %1072 = vmatpush1.msra.mxu0 0.0
        %1073 = vmatprep.subr.mxu0 0.0
        %1074 = vmatpush1.msra.mxu0 0.0
        %1075 = vmatprep.subr.mxu0 0.0
        %1076 = vmatpush1.msra.mxu0 0.0
        %1077 = vmatprep.subr.mxu0 0.0
        %1078 = vmatpush1.msra.mxu0 0.0
        %1079 = vmatprep.subr.mxu0 0.0
        %1080 = vmatpush1.msra.mxu0 0.0
        %1081 = vmatprep.subr.mxu0 0.0
        %1082 = vmatpush1.msra.mxu0 0.0
        %1083 = vmatprep.subr.mxu0 0.0
        %1084 = vmatpush1.msra.mxu0 0.0
        %1085 = vmatprep.subr.mxu0 0.0
        %1086 = vmatpush1.msra.mxu0 0.0
        %1087 = vmatprep.subr.mxu0 0.0
        %1088 = vmatpush1.msra.mxu0 0.0
        %1089 = vmatprep.subr.mxu0 0.0
        %1090 = vmatpush1.msra.mxu0 0.0
        %1091 = vmatprep.subr.mxu0 0.0
        %1092 = vmatpush1.msra.mxu0 0.0
        %1093 = vmatprep.subr.mxu0 0.0
        %1094 = vmatpush1.msra.mxu0 0.0
        %1095 = vmatprep.subr.mxu0 0.0
        %1096 = vmatpush1.msra.mxu0 0.0
        %1097 = vmatprep.subr.mxu0 0.0
        %1098 = vmatpush1.msra.mxu0 0.0
        %1099 = vmatprep.subr.mxu0 0.0
        %1100 = vmatpush1.msra.mxu0 0.0
        %1101 = vmatprep.subr.mxu0 0.0
        %1102 = vmatpush1.msra.mxu0 0.0
        %1103 = vmatprep.subr.mxu0 0.0
        %1104 = vmatpush1.msra.mxu0 0.0
        %1105 = vmatprep.subr.mxu0 0.0
        %1106 = vmatpush1.msra.mxu0 0.0
        %1107 = vmatprep.subr.mxu0 0.0
        %1108 = vmatpush1.msra.mxu0 0.0
        %1109 = vmatprep.subr.mxu0 0.0
        %1110 = vmatpush1.msra.mxu0 0.0
        %1111 = vmatprep.subr.mxu0 0.0
        %1112 = vmatpush1.msra.mxu0 0.0
        %1113 = vmatprep.subr.mxu0 0.0
        %1114 = vmatpush1.msra.mxu0 0.0
        %1115 = vmatprep.subr.mxu0 0.0
        %1116 = vmatpush1.msra.mxu0 0.0
        %1117 = vmatprep.subr.mxu0 0.0
        %1118 = vmatpush1.msra.mxu0 0.0
        %1119 = vmatprep.subr.mxu0 0.0
        %1120 = vmatpush1.msra.mxu0 0.0
        %1121 = vmatprep.mubr.f32.mxu0 0.0
        %1122 = vmatmul.mubr.f32.gmra.mrb[0].mxu0 %v1055
        %v1123 = vpop.f32.mrb[0].mxu0
        %v1124 = vadd.f32 0.0, %v1123
        %v1125 = vpop.f32.mrb[0].mxu0
        %1126 = vdwg.mxu0
        %1128 = vrot.lane.b32.xlu0 %v1124, 32
        %v1129 = vpop.permute.xlu0 %1128
        %v1131 = vadd.f32 %v1050, %v1129
        %vm1132 = vcmask 392448
        %1133 = vst.msk [vmem:[#allocation5] sm:$0xff] %vm1132, %v1131
        %1134 = vst.msk [vmem:[%s1019] sm:$0xff] %vm657, %v1024
        %v1135 = vld [vmem:[#allocation2] sm:$0xff]
        %1137 = vrot.lane.b32.xlu0 %v1135, 80
        %v1138 = vpop.permute.xlu0 %1137
        %1139 = vrot.lane.b32.xlu0 %v479, 80
        %v1140 = vpop.permute.xlu0 %1139
        %v1141 = vsel %vm557, %v1138, 0
        %v1143 = vsel %vm557, %v1140, 0
        %1145 = vmatprep.subr.mxu0 0.0
        %1146 = vmatpush1.xpose.msra.mxu0 %v1143
        %1147 = vmatprep.subr.mxu0 0.0
        %1148 = vmatpush1.xpose.msra.mxu0 0.0
        %1149 = vmatprep.subr.mxu0 0.0
        %1150 = vmatpush1.xpose.msra.mxu0 0.0
        %1151 = vmatprep.subr.mxu0 0.0
        %1152 = vmatpush1.xpose.msra.mxu0 0.0
        %1153 = vmatprep.subr.mxu0 0.0
        %1154 = vmatpush1.xpose.msra.mxu0 0.0
        %1155 = vmatprep.subr.mxu0 0.0
        %1156 = vmatpush1.xpose.msra.mxu0 0.0
        %1157 = vmatprep.subr.mxu0 0.0
        %1158 = vmatpush1.xpose.msra.mxu0 0.0
        %1159 = vmatprep.subr.mxu0 0.0
        %1160 = vmatpush1.xpose.msra.mxu0 0.0
        %1161 = vmatprep.subr.mxu0 0.0
        %1162 = vmatpush1.xpose.msra.mxu0 0.0
        %1163 = vmatprep.subr.mxu0 0.0
        %1164 = vmatpush1.xpose.msra.mxu0 0.0
        %1165 = vmatprep.subr.mxu0 0.0
        %1166 = vmatpush1.xpose.msra.mxu0 0.0
        %1167 = vmatprep.subr.mxu0 0.0
        %1168 = vmatpush1.xpose.msra.mxu0 0.0
        %1169 = vmatprep.subr.mxu0 0.0
        %1170 = vmatpush1.xpose.msra.mxu0 0.0
        %1171 = vmatprep.subr.mxu0 0.0
        %1172 = vmatpush1.xpose.msra.mxu0 0.0
        %1173 = vmatprep.subr.mxu0 0.0
        %1174 = vmatpush1.xpose.msra.mxu0 0.0
        %1175 = vmatprep.subr.mxu0 0.0
        %1176 = vmatpush1.xpose.msra.mxu0 0.0
        %1177 = vmatprep.subr.mxu0 0.0
        %1178 = vmatpush1.xpose.msra.mxu0 0.0
        %1179 = vmatprep.subr.mxu0 0.0
        %1180 = vmatpush1.xpose.msra.mxu0 0.0
        %1181 = vmatprep.subr.mxu0 0.0
        %1182 = vmatpush1.xpose.msra.mxu0 0.0
        %1183 = vmatprep.subr.mxu0 0.0
        %1184 = vmatpush1.xpose.msra.mxu0 0.0
        %1185 = vmatprep.subr.mxu0 0.0
        %1186 = vmatpush1.xpose.msra.mxu0 0.0
        %1187 = vmatprep.subr.mxu0 0.0
        %1188 = vmatpush1.xpose.msra.mxu0 0.0
        %1189 = vmatprep.subr.mxu0 0.0
        %1190 = vmatpush1.xpose.msra.mxu0 0.0
        %1191 = vmatprep.subr.mxu0 0.0
        %1192 = vmatpush1.xpose.msra.mxu0 0.0
        %1193 = vmatprep.subr.mxu0 0.0
        %1194 = vmatpush1.xpose.msra.mxu0 0.0
        %1195 = vmatprep.subr.mxu0 0.0
        %1196 = vmatpush1.xpose.msra.mxu0 0.0
        %1197 = vmatprep.subr.mxu0 0.0
        %1198 = vmatpush1.xpose.msra.mxu0 0.0
        %1199 = vmatprep.subr.mxu0 0.0
        %1200 = vmatpush1.xpose.msra.mxu0 0.0
        %1201 = vmatprep.subr.mxu0 0.0
        %1202 = vmatpush1.xpose.msra.mxu0 0.0
        %1203 = vmatprep.subr.mxu0 0.0
        %1204 = vmatpush1.xpose.msra.mxu0 0.0
        %1205 = vmatprep.subr.mxu0 0.0
        %1206 = vmatpush1.xpose.msra.mxu0 0.0
        %1207 = vmatprep.subr.mxu0 0.0
        %1208 = vmatpush1.xpose.msra.mxu0 0.0
        %1209 = vmatprep.mubr.f32.mxu0 0.0
        %1210 = vmatmul.mubr.f32.gmra.mrb[0].mxu0 %v1141
        %v1211 = vpop.f32.mrb[0].mxu0
        %v1212 = vadd.f32 0.0, %v1211
        %v1213 = vpop.f32.mrb[0].mxu0
        %1214 = vdwg.mxu0
        %s1215 = scalar_lea.vmem [#allocation3], 24
        %v1216 = vld [vmem:[%s1215] sm:$0xff]
        %v1217 = vsel %vm635, %v1212, -inf
        %1218 = vmax.xlane.f32.xlu0 %v1217
        %v1219 = vpop.xlane.xlu0 %1218
        %v1220 = vmax.f32 %v1216, %v1219
        %v1221 = vsub.f32 %v1216, %v1220
        %v1222 = vmul.f32 %v1221, 1.442695
        %v1223 = vpow.pop %v1222
        %1225 = vset.pattern.permute.xlu0 0
        %1226 = vperm.xlu0 %1225, %v1220
        %v1227 = vpop.permute.xlu0 %1226
        %v1229 = vsub.f32 %v1212, %v1227
        %v1230 = vmul.f32 %v1229, 1.442695
        %v1231 = vpow.pop %v1230
        %s1232 = scalar_lea.vmem [#allocation4], 24
        %v1233 = vld [vmem:[%s1232] sm:$0xff]
        %v1234 = vmul.f32 %v1223, %v1233
        %v1235 = vsel %vm635, %v1231, 0.0
        %1236 = vadd.xlane.f32.xlu0 %v1235
        %v1237 = vpop.xlane.xlu0 %1236
        %v1238 = vadd.f32 %v1234, %v1237
        %1239 = vst.msk [vmem:[%s1232] sm:$0xff] %vm657, %v1238
        %v1240 = vld [vmem:[#allocation5] sm:$0xff]
        %1242 = vset.pattern.permute.xlu0 0
        %1243 = vperm.xlu0 %1242, %v1223
        %v1244 = vpop.permute.xlu0 %1243
        %v1246 = vmul.f32 %v1244, %v1240
        %1247 = vrot.lane.b32.xlu0 %v553, 80
        %v1248 = vpop.permute.xlu0 %1247
        %v1251 = vsel %vm635, %v1231, 0
        %1253 = vmatprep.subr.mxu0 0.0
        %1254 = vmatpush1.msra.mxu0 %v1248
        %1255 = vmatprep.subr.mxu0 0.0
        %1256 = vmatpush1.msra.mxu0 0.0
        %1257 = vmatprep.subr.mxu0 0.0
        %1258 = vmatpush1.msra.mxu0 0.0
        %1259 = vmatprep.subr.mxu0 0.0
        %1260 = vmatpush1.msra.mxu0 0.0
        %1261 = vmatprep.subr.mxu0 0.0
        %1262 = vmatpush1.msra.mxu0 0.0
        %1263 = vmatprep.subr.mxu0 0.0
        %1264 = vmatpush1.msra.mxu0 0.0
        %1265 = vmatprep.subr.mxu0 0.0
        %1266 = vmatpush1.msra.mxu0 0.0
        %1267 = vmatprep.subr.mxu0 0.0
        %1268 = vmatpush1.msra.mxu0 0.0
        %1269 = vmatprep.subr.mxu0 0.0
        %1270 = vmatpush1.msra.mxu0 0.0
        %1271 = vmatprep.subr.mxu0 0.0
        %1272 = vmatpush1.msra.mxu0 0.0
        %1273 = vmatprep.subr.mxu0 0.0
        %1274 = vmatpush1.msra.mxu0 0.0
        %1275 = vmatprep.subr.mxu0 0.0
        %1276 = vmatpush1.msra.mxu0 0.0
        %1277 = vmatprep.subr.mxu0 0.0
        %1278 = vmatpush1.msra.mxu0 0.0
        %1279 = vmatprep.subr.mxu0 0.0
        %1280 = vmatpush1.msra.mxu0 0.0
        %1281 = vmatprep.subr.mxu0 0.0
        %1282 = vmatpush1.msra.mxu0 0.0
        %1283 = vmatprep.subr.mxu0 0.0
        %1284 = vmatpush1.msra.mxu0 0.0
        %1285 = vmatprep.subr.mxu0 0.0
        %1286 = vmatpush1.msra.mxu0 0.0
        %1287 = vmatprep.subr.mxu0 0.0
        %1288 = vmatpush1.msra.mxu0 0.0
        %1289 = vmatprep.subr.mxu0 0.0
        %1290 = vmatpush1.msra.mxu0 0.0
        %1291 = vmatprep.subr.mxu0 0.0
        %1292 = vmatpush1.msra.mxu0 0.0
        %1293 = vmatprep.subr.mxu0 0.0
        %1294 = vmatpush1.msra.mxu0 0.0
        %1295 = vmatprep.subr.mxu0 0.0
        %1296 = vmatpush1.msra.mxu0 0.0
        %1297 = vmatprep.subr.mxu0 0.0
        %1298 = vmatpush1.msra.mxu0 0.0
        %1299 = vmatprep.subr.mxu0 0.0
        %1300 = vmatpush1.msra.mxu0 0.0
        %1301 = vmatprep.subr.mxu0 0.0
        %1302 = vmatpush1.msra.mxu0 0.0
        %1303 = vmatprep.subr.mxu0 0.0
        %1304 = vmatpush1.msra.mxu0 0.0
        %1305 = vmatprep.subr.mxu0 0.0
        %1306 = vmatpush1.msra.mxu0 0.0
        %1307 = vmatprep.subr.mxu0 0.0
        %1308 = vmatpush1.msra.mxu0 0.0
        %1309 = vmatprep.subr.mxu0 0.0
        %1310 = vmatpush1.msra.mxu0 0.0
        %1311 = vmatprep.subr.mxu0 0.0
        %1312 = vmatpush1.msra.mxu0 0.0
        %1313 = vmatprep.subr.mxu0 0.0
        %1314 = vmatpush1.msra.mxu0 0.0
        %1315 = vmatprep.subr.mxu0 0.0
        %1316 = vmatpush1.msra.mxu0 0.0
        %1317 = vmatprep.mubr.f32.mxu0 0.0
        %1318 = vmatmul.mubr.f32.gmra.mrb[0].mxu0 %v1251
        %v1319 = vpop.f32.mrb[0].mxu0
        %v1320 = vadd.f32 0.0, %v1319
        %v1321 = vpop.f32.mrb[0].mxu0
        %1322 = vdwg.mxu0
        %1324 = vrot.lane.b32.xlu0 %v1320, 48
        %v1325 = vpop.permute.xlu0 %1324
        %v1327 = vadd.f32 %v1246, %v1325
        %vm1328 = vcmask 523648
        %1329 = vst.msk [vmem:[#allocation5] sm:$0xff] %vm1328, %v1327
        %1330 = vst.msk [vmem:[%s1215] sm:$0xff] %vm657, %v1220
        // Predicated region
        $region49: #{attention_forward.1} parent=43 // pred_check
          %p1331 = pneg %p307
        $region50: #{attention_forward.1} parent=43 // pred_check_branch
          %1333 = sbr.rel (%p1331) target = $region52
        $region51: #{attention_forward.1} parent=43 // pred_region
          %v1334 = vld [vmem:[#allocation5] sm:$0xff]
          %v1335 = vld [vmem:[#allocation4] sm:$0xff]
          %v1336 = vrcp.pop %v1335
          %1338 = vset.pattern.permute.xlu0 0
          %1339 = vperm.xlu0 %1338, %v1336
          %v1340 = vpop.permute.xlu0 %1339
          %v1342 = vmul.f32 %v1334, %v1340
          %1343 = vst.msk [vmem:[#allocation5] sm:$0xff] %vm557, %v1342
          %v1344 = vld [vmem:[#allocation5] sm:$0xff]
          %v1345 = vld [vmem:[%s839] sm:$0xff]
          %v1346 = vrcp.pop %v1345
          %1348 = vset.pattern.permute.xlu0 0
          %1349 = vperm.xlu0 %1348, %v1346
          %v1350 = vpop.permute.xlu0 %1349
          %v1352 = vmul.f32 %v1344, %v1350
          %1353 = vst.msk [vmem:[#allocation5] sm:$0xff] %vm936, %v1352
          %v1354 = vld [vmem:[#allocation5] sm:$0xff]
          %v1355 = vld [vmem:[%s1036] sm:$0xff]
          %v1356 = vrcp.pop %v1355
          %1358 = vset.pattern.permute.xlu0 0
          %1359 = vperm.xlu0 %1358, %v1356
          %v1360 = vpop.permute.xlu0 %1359
          %v1362 = vmul.f32 %v1354, %v1360
          %1363 = vst.msk [vmem:[#allocation5] sm:$0xff] %vm1132, %v1362
          %v1364 = vld [vmem:[#allocation5] sm:$0xff]
          %v1365 = vld [vmem:[%s1232] sm:$0xff]
          %v1366 = vrcp.pop %v1365
          %1368 = vset.pattern.permute.xlu0 0
          %1369 = vperm.xlu0 %1368, %v1366
          %v1370 = vpop.permute.xlu0 %1369
          %v1372 = vmul.f32 %v1364, %v1370
          %1373 = vst.msk [vmem:[#allocation5] sm:$0xff] %vm1328, %v1372
          %v1374 = vld [vmem:[#allocation5] sm:$0xff]
          %v1375 = vld [vmem:[%s5] sm:$0xff]
          %v1376 = vld [vmem:[%s5 + $0x8] sm:$0xff]
          %v1377 = vld [vmem:[%s5 + $0x10] sm:$0xff]
          %v1378 = vld [vmem:[%s5 + $0x18] sm:$0xff]
          %v1379 = vld [vmem:[%s5 + $0x20] sm:$0xff]
          %v1380 = vld [vmem:[%s5 + $0x28] sm:$0xff]
          %v1381 = vld [vmem:[%s5 + $0x30] sm:$0xff]
          %v1382 = vld [vmem:[%s5 + $0x38] sm:$0xff]
          %vm1383 = vcmask 523264
          %v1385 = vsel %vm1383, %v1374, 0
          %1387 = vmatprep.subr.mxu0 0.0
          %1388 = vmatpush1.msra.mxu0 %v1375
          %1389 = vmatprep.subr.mxu0 0.0
          %1390 = vmatpush1.msra.mxu0 %v1376
          %1391 = vmatprep.subr.mxu0 0.0
          %1392 = vmatpush1.msra.mxu0 %v1377
          %1393 = vmatprep.subr.mxu0 0.0
          %1394 = vmatpush1.msra.mxu0 %v1378
          %1395 = vmatprep.subr.mxu0 0.0
          %1396 = vmatpush1.msra.mxu0 %v1379
          %1397 = vmatprep.subr.mxu0 0.0
          %1398 = vmatpush1.msra.mxu0 %v1380
          %1399 = vmatprep.subr.mxu0 0.0
          %1400 = vmatpush1.msra.mxu0 %v1381
          %1401 = vmatprep.subr.mxu0 0.0
          %1402 = vmatpush1.msra.mxu0 %v1382
          %1403 = vmatprep.subr.mxu0 0.0
          %1404 = vmatpush1.msra.mxu0 0.0
          %1405 = vmatprep.subr.mxu0 0.0
          %1406 = vmatpush1.msra.mxu0 0.0
          %1407 = vmatprep.subr.mxu0 0.0
          %1408 = vmatpush1.msra.mxu0 0.0
          %1409 = vmatprep.subr.mxu0 0.0
          %1410 = vmatpush1.msra.mxu0 0.0
          %1411 = vmatprep.subr.mxu0 0.0
          %1412 = vmatpush1.msra.mxu0 0.0
          %1413 = vmatprep.subr.mxu0 0.0
          %1414 = vmatpush1.msra.mxu0 0.0
          %1415 = vmatprep.subr.mxu0 0.0
          %1416 = vmatpush1.msra.mxu0 0.0
          %1417 = vmatprep.subr.mxu0 0.0
          %1418 = vmatpush1.msra.mxu0 0.0
          %1419 = vmatprep.subr.mxu0 0.0
          %1420 = vmatpush1.msra.mxu0 0.0
          %1421 = vmatprep.subr.mxu0 0.0
          %1422 = vmatpush1.msra.mxu0 0.0
          %1423 = vmatprep.subr.mxu0 0.0
          %1424 = vmatpush1.msra.mxu0 0.0
          %1425 = vmatprep.subr.mxu0 0.0
          %1426 = vmatpush1.msra.mxu0 0.0
          %1427 = vmatprep.subr.mxu0 0.0
          %1428 = vmatpush1.msra.mxu0 0.0
          %1429 = vmatprep.subr.mxu0 0.0
          %1430 = vmatpush1.msra.mxu0 0.0
          %1431 = vmatprep.subr.mxu0 0.0
          %1432 = vmatpush1.msra.mxu0 0.0
          %1433 = vmatprep.subr.mxu0 0.0
          %1434 = vmatpush1.msra.mxu0 0.0
          %1435 = vmatprep.subr.mxu0 0.0
          %1436 = vmatpush1.msra.mxu0 0.0
          %1437 = vmatprep.subr.mxu0 0.0
          %1438 = vmatpush1.msra.mxu0 0.0
          %1439 = vmatprep.subr.mxu0 0.0
          %1440 = vmatpush1.msra.mxu0 0.0
          %1441 = vmatprep.subr.mxu0 0.0
          %1442 = vmatpush1.msra.mxu0 0.0
          %1443 = vmatprep.subr.mxu0 0.0
          %1444 = vmatpush1.msra.mxu0 0.0
          %1445 = vmatprep.subr.mxu0 0.0
          %1446 = vmatpush1.msra.mxu0 0.0
          %1447 = vmatprep.subr.mxu0 0.0
          %1448 = vmatpush1.msra.mxu0 0.0
          %1449 = vmatprep.subr.mxu0 0.0
          %1450 = vmatpush1.msra.mxu0 0.0
          %1451 = vmatprep.mubr.f32.mxu0 0.0
          %1452 = vmatmul.mubr.f32.gmra.mrb[0].mxu0 %v1385
          %v1453 = vpop.f32.mrb[0].mxu0
          %v1454 = vadd.f32 0.0, %v1453
          %v1455 = vpop.f32.mrb[0].mxu0
          %1456 = vdwg.mxu0
          %1457 = vst.msk [vmem:[%s292] sm:$0xff] %vm408, %v1454
        $region52: #{attention_forward.1} parent=43 // pred_fallthru
          _
        %s1458 = sand.u32 %s189, 1
        %s1459 = scalar_lea.sflag [#allocation7], %s1458
        %s1460 = sand.u32 %s189, 1
        %s1461 = smul.addr %s1460, 8
        %s1462 = scalar_lea.vmem [#allocation6], %s1461
        // Predicated region
        $region53: #{attention_forward.1} parent=43 // pred_check
          %p1463 = pneg %p199
        $region54: #{attention_forward.1} parent=43 // pred_check_branch
          %1465 = sbr.rel (%p1463) target = $region56
        $region55: #{attention_forward.1} parent=43 // pred_region
          %s1467 = ssub.s32 128, 128
          %1468 = vsyncadd %s1459, %s1467
          %s1469 = sadd.s32 %s26, %s25
          %s1470 = smul.addr %s1469, 128
          %s1471 = scalar_lea.hbm %s6, %s1470
          %s1473 = sshll.u32 %s1462, 4
          %s1474 = int_to_ptr.vmem [resolvable:$true] %s1473
          %1476 = dma.vmem_to_hbm [thread:$0]  %s1474, 128, %s1471, %s1459
        $region56: #{attention_forward.1} parent=43 // pred_fallthru
          _
      $region44: #{attention_forward.1} parent=5 // pred_fallthru
        _
      %p1477 = scmp.le.s32.totalorder 2, %s15
      // Predicated region
      $region57: #{attention_forward.1} parent=5 // pred_check
        %p1478 = pneg %p1477
      $region58: #{attention_forward.1} parent=5 // pred_check_branch
        %1480 = sbr.rel (%p1478) target = $region60
      $region59: #{attention_forward.1} parent=5 // pred_region
        %s1481 = ssub.s32 %s15, 2
        // Predicated region
        $region61: #{attention_forward.1} parent=59 // pred_check
          %p1482 = pneg %p205
        $region62: #{attention_forward.1} parent=59 // pred_check_branch
          %1484 = sbr.rel (%p1482) target = $region64
        $region63: #{attention_forward.1} parent=59 // pred_region
          %s1485 = sand.u32 %s190, 1
          %s1486 = scalar_lea.sflag [#allocation7], %s1485
          %s1487 = sand.u32 %s190, 1
          %s1488 = smul.addr %s1487, 8
          %s1489 = scalar_lea.vmem [#allocation6], %s1488
          %1490 = dma.done %s1486, 128
        $region64: #{attention_forward.1} parent=59 // pred_fallthru
          _
      $region60: #{attention_forward.1} parent=5 // pred_fallthru
        _
    $region6: #{attention_forward.1} parent=1 // loop_footer
      %s19 = sadd.s32 1, %s15
    $region7: #{attention_forward.1} parent=1 // loop_footer_branch
      %14 = sbr.rel target = $region3
    $region8: #{attention_forward.1} parent=1 // loop_exit
      _
    %1491 = vsyncpa [#allocation7], 1
    %s1492 = scalar_lea.sflag [#allocation7], 1
    %1493 = vsyncpa %s1492, 1

</llo_original>
